<compile_context>
chip_gen: v7x
topology: tpu7x:2x2x1
jax: 0.10.0
libtpu: 0.0.40
codegen_flags: <defaults>
</compile_context>

<pallas_src>
import functools
from itertools import combinations
from typing import NamedTuple

import numpy as np
import jax
import jax.numpy as jnp
from jax import lax
from jax.experimental import pallas as pl
from jax.experimental.pallas import tpu as pltpu

LANE = 128     # vreg lane width
SUBLANE = 8    # f32 sublanes per vreg


# ----------------------------------------------------------------------------
# small helpers
# ----------------------------------------------------------------------------
def _ceil_to(x, m):
    return ((x + m - 1) // m) * m


def _pad2d(x, rows, cols):
    x = jnp.asarray(x, jnp.float32)
    return jnp.pad(x, ((0, rows - x.shape[0]), (0, cols - x.shape[1])))


def _pad_vec(v, cols):
    v = jnp.asarray(v, jnp.float32).reshape(1, -1)
    return jnp.pad(v, ((0, 0), (0, cols - v.shape[1])))


def _comb_index(u, v, N):
    # index of pair (u, v), u < v, in combinations(range(N), 2) order
    return u * N - u * (u + 1) // 2 + (v - u - 1)


class Dims(NamedTuple):
    B: int
    T: int
    MAX_N: int
    KKD: int
    NFB: int
    NDIM: int
    NMID: int
    NACT: int
    MAX_N_P: int
    KKD_P: int
    NFB_P: int
    NMID_P: int
    NACT_P: int
    MAX_P_P: int
    MAX_C_P: int
    OUTI_P: int
    TM: int
    TK: int
    NK: int
    M_P: int


def make_dims(B, T, MAX_N, KKD, NFB, NDIM, NMID, NACT):
    assert NDIM % LANE == 0, "NDIM is hard-coded to 128 in the module"
    MAX_N_P = _ceil_to(MAX_N, SUBLANE)
    MAX_P_P = _ceil_to(max(MAX_N * (MAX_N - 1), 1), SUBLANE)          # pairs i != j
    MAX_C_P = _ceil_to(max(MAX_N * (MAX_N - 1) // 2, 1), SUBLANE)     # C(N,2) z-nodes
    KKD_P = _ceil_to(KKD, LANE)
    TK = 512 if KKD_P >= 512 else KKD_P          # stream fc_emb_1 weight in TK-slices
    KKD_P = _ceil_to(KKD_P, TK)
    NK = KKD_P // TK
    NFB_P = _ceil_to(NFB, LANE)
    NMID_P = _ceil_to(NMID, LANE)
    NACT_P = _ceil_to(NACT, LANE)
    OUTI_P = LANE                 # fc_interactions_final has 2 outputs -> pad to 128 lanes
    M = B * MAX_N_P               # key-frame-only embedding rows
    TM = 256 if M >= 256 else _ceil_to(M, SUBLANE)   # fixed big tile, no divisor search
    M_P = _ceil_to(M, TM)
    return Dims(B, T, MAX_N, KKD, NFB, NDIM, NMID, NACT,
                MAX_N_P, KKD_P, NFB_P, NMID_P, NACT_P,
                MAX_P_P, MAX_C_P, OUTI_P, TM, TK, NK, M_P)


def _emb_vmem_bytes(d):
    b = (2 * d.TM * d.TK * 2                 # feats tiles   (bf16, double-buffered)
         + 2 * d.TK * d.NFB_P * 2            # w_emb K-slices (bf16, double-buffered)
         + 3 * d.NFB_P * d.NDIM * 2          # w_node / w_imid halves (bf16, Buffered(1))
         + (d.NFB_P + 2 * d.NDIM) * 4        # biases (f32)
         + 2 * 3 * d.TM * d.NDIM * 4         # u/v/a output tiles (f32, double-buffered)
         + d.TM * d.NFB_P * 4)               # f32 accumulator scratch
    return int(min(max(2 * b, 32 << 20), 100 << 20))


def _frame_vmem_bytes(d):
    per_frame = (3 * d.MAX_N_P * d.NDIM * 4          # u / v / a blocks
                 + (3 * d.MAX_P_P + d.MAX_C_P) * 4   # int32 index vectors
                 + d.MAX_N_P * d.NACT_P * 4          # actn out block
                 + d.MAX_P_P * d.OUTI_P * 4)         # inter out block
    weights = (d.NDIM * d.NMID_P + d.NMID_P * d.NACT_P + d.NDIM * d.OUTI_P
               + d.NDIM + 3 * d.NMID_P + d.NACT_P + d.OUTI_P) * 4
    live = (d.MAX_P_P * (2 * d.MAX_N_P + 2 * d.NDIM + 2 * d.MAX_C_P + d.OUTI_P)
            + d.MAX_C_P * (d.MAX_P_P + d.NDIM)
            + d.MAX_N_P * (d.NDIM + 2 * d.NMID_P + d.NACT_P)) * 4
    return int(min(max(2 * (2 * per_frame + weights + live), 32 << 20), 100 << 20))


# ----------------------------------------------------------------------------
# Kernel 1: fc_emb_1 (K-tiled, accumulated) -> ReLU -> {fc_action_node,
#           fc_interactions_mid bs_i-half, bs_j-half} on key-frame node rows.
# ----------------------------------------------------------------------------
def _emb_kernel(f_ref, we_ref, be_ref, wn_ref, bn_ref, wa_ref, wb_ref,
                u_ref, v_ref, a_ref, acc_ref):
    k = pl.program_id(1)

    @pl.when(k == 0)
    def _init():
        acc_ref[...] = jnp.zeros_like(acc_ref)

    # fc_emb_1: stream the big weight in TK-slices, accumulate in f32 scratch.
    acc_ref[...] += jnp.dot(f_ref[...], we_ref[...],
                            preferred_element_type=jnp.float32)

    @pl.when(k == pl.num_programs(1) - 1)
    def _finalize():
        # bias + ReLU (dropout_emb_1 is identity at eval time)
        x = jnp.maximum(acc_ref[...] + be_ref[...], 0.0)
        xb = x.astype(jnp.bfloat16)
        # fc_action_node + ReLU, fused: x never leaves VMEM.
        a = jnp.dot(xb, wn_ref[...], preferred_element_type=jnp.float32) + bn_ref[...]
        a_ref[...] = jnp.maximum(a, 0.0)
        # project-then-gather: the two halves of fc_interactions_mid applied to
        # the N node rows here (NFB->NDIM), so the frame kernel only gathers.
        u_ref[...] = jnp.dot(xb, wa_ref[...], preferred_element_type=jnp.float32)
        v_ref[...] = jnp.dot(xb, wb_ref[...], preferred_element_type=jnp.float32)


def _emb_forward(feats, pp, d):
    const = lambda shape: pl.BlockSpec(shape, lambda i, k: (0, 0),
                                       pipeline_mode=pl.Buffered(1))
    out_spec = pl.BlockSpec((d.TM, d.NDIM), lambda i, k: (i, 0))
    return pl.pallas_call(
        _emb_kernel,
        out_shape=(jax.ShapeDtypeStruct((d.M_P, d.NDIM), jnp.float32),
                   jax.ShapeDtypeStruct((d.M_P, d.NDIM), jnp.float32),
                   jax.ShapeDtypeStruct((d.M_P, d.NDIM), jnp.float32)),
        grid=(d.M_P // d.TM, d.NK),
        in_specs=[
            pl.BlockSpec((d.TM, d.TK), lambda i, k: (i, k)),      # feats row/K tile (bf16)
            pl.BlockSpec((d.TK, d.NFB_P), lambda i, k: (k, 0)),   # w_emb K-slice (bf16)
            const((1, d.NFB_P)),                                  # b_emb
            const((d.NFB_P, d.NDIM)),                             # w_node (bf16)
            const((1, d.NDIM)),                                   # b_node
            const((d.NFB_P, d.NDIM)),                             # w_imid bs_i half (bf16)
            const((d.NFB_P, d.NDIM)),                             # w_imid bs_j half (bf16)
        ],
        out_specs=(out_spec, out_spec, out_spec),                 # u, v, actn
        scratch_shapes=[pltpu.VMEM((d.TM, d.NFB_P), jnp.float32)],
        compiler_params=pltpu.CompilerParams(
            dimension_semantics=("parallel", "arbitrary"),
            vmem_limit_bytes=_emb_vmem_bytes(d)),
    )(feats, pp["w_emb"], pp["b_emb"], pp["w_node"], pp["b_node"],
      pp["w_imid_a"], pp["w_imid_b"])


# ----------------------------------------------------------------------------
# Kernel 2: fully fused per-key-frame pipeline (grid over frames, "parallel")
# ----------------------------------------------------------------------------
def _frame_kernel(gate_ref,                               # scalar prefetch (SMEM)
                  u_ref, v_ref, a_ref,                    # per-frame node features
                  pi_ref, pj_ref, zsel_ref, sz_ref,       # int32 index vectors
                  bim_ref,
                  wmid_ref, bmid_ref, lng_ref, lnb_ref,
                  wfin_ref, bfin_ref, wif_ref, bif_ref,
                  actn_out_ref, inter_out_ref,
                  *, nmid):
    b = pl.program_id(0)
    n_rows = u_ref.shape[0]          # MAX_N_P
    p_rows = pi_ref.shape[0]         # MAX_P_P
    c_rows = zsel_ref.shape[0]       # MAX_C_P

    u = u_ref[...]                   # bs_i @ w_imid_a   [MAX_N_P, NDIM]
    v = v_ref[...]                   # bs_j @ w_imid_b   [MAX_N_P, NDIM]
    a = a_ref[...]                   # actn scores       [MAX_N_P, NDIM]

    # --- pairwise stage (gather-after-project) ------------------------------
    # one-hot gathers built in-VMEM from int32 index vectors (iota == idx);
    # padded rows carry idx = -1 -> all-zero one-hot rows.
    node_col = lax.broadcasted_iota(jnp.int32, (p_rows, n_rows), 1)
    pi_oh = (node_col == pi_ref[...]).astype(jnp.float32)
    pj_oh = (node_col == pj_ref[...]).astype(jnp.float32)
    inter = jnp.maximum(
        jnp.dot(pi_oh, u, preferred_element_type=jnp.float32)
        + jnp.dot(pj_oh, v, preferred_element_type=jnp.float32)
        + bim_ref[...], 0.0)                                     # [MAX_P_P, NDIM]

    # get_z_nodefeature: upper-triangular rows of the packed ordered-pair matrix
    pair_col = lax.broadcasted_iota(jnp.int32, (c_rows, p_rows), 1)
    z_oh = (pair_col == zsel_ref[...]).astype(jnp.float32)
    z = jnp.dot(z_oh, inter, preferred_element_type=jnp.float32)  # [MAX_C_P, NDIM]

    # TODO(synk): factor_mpnn (self.fgnn), fc_edge + h/g factor features,
    # MotionFgnn and meanfield are external/undefined -> identity stubs
    # (actn_node_score == a, motions == a, fc_edge matmul elided as dead work).
    gate = (gate_ref[b] > 0).astype(jnp.float32)   # 1.0 iff N > 2 for this frame
    a_sum = (2.0 + gate) * a                       # actn + gate*actn_node + motions

    # fc_action_mid -> LayerNorm([NMID]) -> ReLU -> fc_action_final, fused.
    h = jnp.dot(a_sum, wmid_ref[...], preferred_element_type=jnp.float32) + bmid_ref[...]
    mask = (lax.broadcasted_iota(jnp.int32, (1, h.shape[-1]), 1) < nmid
            ).astype(jnp.float32)                  # real NMID cols only
    inv_n = 1.0 / float(nmid)
    mu = jnp.sum(h * mask, axis=-1, keepdims=True) * inv_n
    cen = (h - mu) * mask
    var = jnp.sum(cen * cen, axis=-1, keepdims=True) * inv_n
    hn = jnp.maximum(cen * lax.rsqrt(var + 1e-5) * lng_ref[...] + lnb_ref[...], 0.0)
    actn_out_ref[...] = (jnp.dot(hn, wfin_ref[...], preferred_element_type=jnp.float32)
                         + bfin_ref[...])

    # interaction head: symmetric z scatter (packEdgeFeature rows) for N > 2,
    # interaction_flat for N <= 2, selected with the scalar gate (no Si matmul).
    comb_col = lax.broadcasted_iota(jnp.int32, (p_rows, c_rows), 1)
    sz_oh = (comb_col == sz_ref[...]).astype(jnp.float32)
    fin_z = jnp.dot(sz_oh, z, preferred_element_type=jnp.float32)
    fin_in = gate * fin_z + (1.0 - gate) * inter
    inter_out_ref[...] = (jnp.dot(fin_in, wif_ref[...], preferred_element_type=jnp.float32)
                          + bif_ref[...])


def _frame_forward(u3, v3, a3, gate, pi, pj, zsel, sz, pp, d):
    B = d.B
    shared = lambda b, g: (0, 0)
    keyed = lambda b, g: (b, 0, 0)
    const = lambda shape: pl.BlockSpec(shape, shared, pipeline_mode=pl.Buffered(1))
    grid_spec = pltpu.PrefetchScalarGridSpec(
        num_scalar_prefetch=1,
        grid=(B,),
        in_specs=[
            pl.BlockSpec((None, d.MAX_N_P, d.NDIM), keyed),    # u
            pl.BlockSpec((None, d.MAX_N_P, d.NDIM), keyed),    # v
            pl.BlockSpec((None, d.MAX_N_P, d.NDIM), keyed),    # actn
            pl.BlockSpec((None, d.MAX_P_P, 1), keyed),         # pi idx
            pl.BlockSpec((None, d.MAX_P_P, 1), keyed),         # pj idx
            pl.BlockSpec((None, d.MAX_C_P, 1), keyed),         # zsel idx
            pl.BlockSpec((None, d.MAX_P_P, 1), keyed),         # sz idx
            const((1, d.NDIM)),                                # b_imid
            const((d.NDIM, d.NMID_P)),                         # w_mid
            const((1, d.NMID_P)),                              # b_mid
            const((1, d.NMID_P)),                              # ln gamma
            const((1, d.NMID_P)),                              # ln beta
            const((d.NMID_P, d.NACT_P)),                       # w_fin
            const((1, d.NACT_P)),                              # b_fin
            const((d.NDIM, d.OUTI_P)),                         # w_ifin
            const((1, d.OUTI_P)),                              # b_ifin
        ],
        out_specs=(
            pl.BlockSpec((None, d.MAX_N_P, d.NACT_P), keyed),
            pl.BlockSpec((None, d.MAX_P_P, d.OUTI_P), keyed),
        ),
    )
    return pl.pallas_call(
        functools.partial(_frame_kernel, nmid=d.NMID),
        out_shape=(jax.ShapeDtypeStruct((B, d.MAX_N_P, d.NACT_P), jnp.float32),
                   jax.ShapeDtypeStruct((B, d.MAX_P_P, d.OUTI_P), jnp.float32)),
        grid_spec=grid_spec,
        compiler_params=pltpu.CompilerParams(
            dimension_semantics=("parallel",),
            vmem_limit_bytes=_frame_vmem_bytes(d)),
    )(gate, u3, v3, a3, pi, pj, zsel, sz,
      pp["b_imid"], pp["w_mid"], pp["b_mid"], pp["ln_g"], pp["ln_b"],
      pp["w_fin"], pp["b_fin"], pp["w_ifin"], pp["b_ifin"])


# ----------------------------------------------------------------------------
# Parameter handling
# ----------------------------------------------------------------------------
def kaiming(key, fan_in, fan_out):
    return (jax.random.normal(key, (fan_in, fan_out), jnp.float32)
            * np.sqrt(2.0 / fan_in))


def init_params(key, KKD, NFB, NDIM, NMID, NACT):
    ks = jax.random.split(key, 8)
    return {
        "w_emb":  kaiming(ks[0], KKD, NFB),      "b_emb":  jnp.zeros((NFB,)),
        "w_node": kaiming(ks[1], NFB, NDIM),     "b_node": jnp.zeros((NDIM,)),
        "w_imid": kaiming(ks[2], 2 * NFB, NDIM), "b_imid": jnp.zeros((NDIM,)),
        "w_mid":  kaiming(ks[3], NDIM, NMID),    "b_mid":  jnp.zeros((NMID,)),
        "ln_g":   jnp.ones((NMID,)),             "ln_b":   jnp.zeros((NMID,)),
        "w_fin":  kaiming(ks[4], NMID, NACT),    "b_fin":  jnp.zeros((NACT,)),
        "w_ifin": kaiming(ks[5], NDIM, 2),       "b_ifin": jnp.zeros((2,)),
        # lambda_h / lambda_g only feed the external meanfield(); kept so they are
        # not dropped once meanfield exists.  fc_edge / fgnn weights are omitted:
        # their output feeds only the external factor_mpnn (dead work).
        "lambda_h": jnp.array([0.5], jnp.float32),
        "lambda_g": jnp.array([0.5], jnp.float32),
    }


def _pad_params(params, d):
    w_imid = jnp.asarray(params["w_imid"], jnp.float32)
    return {
        # bf16 matmul operands (f32 accumulation inside the kernels)
        "w_emb":    _pad2d(params["w_emb"], d.KKD_P, d.NFB_P).astype(jnp.bfloat16),
        "w_node":   _pad2d(params["w_node"], d.NFB_P, d.NDIM).astype(jnp.bfloat16),
        "w_imid_a": _pad2d(w_imid[:d.NFB], d.NFB_P, d.NDIM).astype(jnp.bfloat16),
        "w_imid_b": _pad2d(w_imid[d.NFB:], d.NFB_P, d.NDIM).astype(jnp.bfloat16),
        # f32 biases / small frame-kernel weights
        "b_emb":    _pad_vec(params["b_emb"], d.NFB_P),
        "b_node":   _pad_vec(params["b_node"], d.NDIM),
        "b_imid":   _pad_vec(params["b_imid"], d.NDIM),
        "w_mid":    _pad2d(params["w_mid"], d.NDIM, d.NMID_P),
        "b_mid":    _pad_vec(params["b_mid"], d.NMID_P),
        "ln_g":     _pad_vec(params["ln_g"], d.NMID_P),     # zero-padded -> pad cols stay 0
        "ln_b":     _pad_vec(params["ln_b"], d.NMID_P),
        "w_fin":    _pad2d(params["w_fin"], d.NMID_P, d.NACT_P),
        "b_fin":    _pad_vec(params["b_fin"], d.NACT_P),
        "w_ifin":   _pad2d(params["w_ifin"], d.NDIM, d.OUTI_P),
        "b_ifin":   _pad_vec(params["b_ifin"], d.OUTI_P),
    }


# ----------------------------------------------------------------------------
# Host-side per-frame int32 index vectors (replace the old f32 one-hot tables)
# ----------------------------------------------------------------------------
def _build_frame_tables(box_nums, key_frames, d):
    B = d.B
    kf = np.asarray(key_frames, np.int32).reshape(B)
    gate = np.zeros((B,), np.int32)
    pi = np.full((B, d.MAX_P_P, 1), -1, np.int32)
    pj = np.full((B, d.MAX_P_P, 1), -1, np.int32)
    zsel = np.full((B, d.MAX_C_P, 1), -1, np.int32)
    sz = np.full((B, d.MAX_P_P, 1), -1, np.int32)
    Ns = []
    for b in range(B):
        t = int(kf[b])
        N = int(box_nums[b][t])
        Ns.append(N)
        pairs = [(i, j) for i in range(N) for j in range(N) if i != j]
        for p, (i, j) in enumerate(pairs):
            pi[b, p, 0] = i
            pj[b, p, 0] = j
        for k, (u, v) in enumerate(combinations(range(N), 2)):
            zsel[b, k, 0] = u * (N - 1) + v - 1
        if N > 2:
            gate[b] = 1
            for p, (i, j) in enumerate(pairs):
                sz[b, p, 0] = _comb_index(min(i, j), max(i, j), N)
    return kf, gate, pi, pj, zsel, sz, Ns


# ----------------------------------------------------------------------------
# Forward pass
# ----------------------------------------------------------------------------
@functools.partial(jax.jit, static_argnames=("dims",))
def _forward_core(params, boxes_feats, kf, gate, pi, pj, zsel, sz, *, dims):
    d = dims
    pp = _pad_params(params, d)
    # TODO(synk): inception backbone + F.interpolate + roi_align are external
    # undefined modules; we start from their output (boxes_feats).
    f = jnp.asarray(boxes_feats, jnp.float32)
    # Key-frame-only embedding: only key frames are consumed downstream with the
    # external fgnn / MotionFgnn stubbed out (T-fold less work + HBM traffic).
    # TODO(synk): embed all T frames again once MotionFgnn / fgnn are real.
    f_key = f[jnp.arange(d.B), kf]                                    # [B, MAX_N, KKD]
    f_key = jnp.pad(f_key, ((0, 0),
                            (0, d.MAX_N_P - d.MAX_N),
                            (0, d.KKD_P - d.KKD)))
    f_rows = f_key.reshape(d.B * d.MAX_N_P, d.KKD_P)
    f_rows = jnp.pad(f_rows, ((0, d.M_P - d.B * d.MAX_N_P), (0, 0)))
    f_rows = f_rows.astype(jnp.bfloat16)
    u, v, a = _emb_forward(f_rows, pp, d)
    M = d.B * d.MAX_N_P
    u3 = u[:M].reshape(d.B, d.MAX_N_P, d.NDIM)
    v3 = v[:M].reshape(d.B, d.MAX_N_P, d.NDIM)
    a3 = a[:M].reshape(d.B, d.MAX_N_P, d.NDIM)
    # TODO(synk): MotionFgnn is external; motions == actn (computed in-kernel).
    return _frame_forward(u3, v3, a3, gate, pi, pj, zsel, sz, pp, d)


def forward(params, boxes_feats, box_nums, key_frames):
    """boxes_feats: [B, T, MAX_N, K*K*D]; box_nums/key_frames: host int arrays."""
    B, T, MAX_N, KKD = boxes_feats.shape
    NFB = params["w_emb"].shape[1]
    NDIM = params["w_node"].shape[1]
    NMID = params["w_mid"].shape[1]
    NACT = params["w_fin"].shape[1]
    d = make_dims(B, T, MAX_N, KKD, NFB, NDIM, NMID, NACT)
    kf, gate, pi, pj, zsel, sz, Ns = _build_frame_tables(box_nums, key_frames, d)
    actn_p, inter_p = _forward_core(
        params, boxes_feats,
        jnp.asarray(kf), jnp.asarray(gate),
        jnp.asarray(pi), jnp.asarray(pj), jnp.asarray(zsel), jnp.asarray(sz),
        dims=d)
    # TODO(synk): meanfield() is external/undefined; return pre-meanfield scores.
    acts = [actn_p[b, :Ns[b], :NACT] for b in range(B)]
    inters = [inter_p[b, :Ns[b] * (Ns[b] - 1), :2] for b in range(B)]
    return jnp.concatenate(acts, axis=0), jnp.concatenate(inters, axis=0)


# ----------------------------------------------------------------------------
# Pure-numpy reference (same stubbed semantics) for correctness validation
# ----------------------------------------------------------------------------
def _reference_forward(params, boxes_feats, box_nums, key_frames):
    p = {k: np.asarray(v, np.float32) for k, v in params.items()}

    def lin(x, w, b, relu=False):
        y = x @ w + b
        return np.maximum(y, 0.0) if relu else y

    B, T, MAX_N, KKD = boxes_feats.shape
    bf = np.asarray(boxes_feats, np.float32)
    x = lin(bf.reshape(-1, KKD), p["w_emb"], p["b_emb"], relu=True)
    actn = lin(x, p["w_node"], p["b_node"], relu=True)
    x = x.reshape(B, T, MAX_N, -1)
    actn = actn.reshape(B, T, MAX_N, -1)
    motions = actn                            # external MotionFgnn stubbed to identity
    acts, inters = [], []
    for b in range(B):
        t = int(key_frames[b])
        N = int(box_nums[b][t])
        bs = x[b, t, :N]
        a = actn[b, t, :N]
        pairs = [(i, j) for i in range(N) for j in range(N) if i != j]
        pi = np.array([i for i, _ in pairs])
        pj = np.array([j for _, j in pairs])
        inter = lin(np.concatenate([bs[pi], bs[pj]], -1),
                    p["w_imid"], p["b_imid"], relu=True)
        z_sel = np.array([i * (N - 1) + j - 1 for (i, j) in combinations(range(N), 2)])
        z = inter[z_sel]
        if N > 2:
            sel = np.array([_comb_index(min(i, j), max(i, j), N) for (i, j) in pairs])
            fin_in = z[sel]
            a_sum = a + a + motions[b, t, :N]      # identity fgnn: actn_node_score == a
        else:
            fin_in = inter
            a_sum = a + motions[b, t, :N]
        h = a_sum @ p["w_mid"] + p["b_mid"]
        mu = h.mean(-1, keepdims=True)
        var = ((h - mu) ** 2).mean(-1, keepdims=True)
        hn = np.maximum((h - mu) / np.sqrt(var + 1e-5) * p["ln_g"] + p["ln_b"], 0.0)
        acts.append(hn @ p["w_fin"] + p["b_fin"])
        inters.append(fin_in @ p["w_ifin"] + p["b_ifin"])
    return np.concatenate(acts, 0), np.concatenate(inters, 0)


# ----------------------------------------------------------------------------
# Demo
# ----------------------------------------------------------------------------
if __name__ == "__main__":
    # cfg-equivalent small shapes
    B, T, MAX_N = 2, 3, 4
    D_EMB, K = 4, 5                  # cfg.emb_features, cfg.crop_size[0]
    KKD = K * K * D_EMB              # 100
    NFB = 32                         # cfg.num_features_boxes
    NDIM, NMID = 128, 64             # hard-coded in the module
    NUM_ACTIONS = 5

    key = jax.random.PRNGKey(0)
    kp, kx = jax.random.split(key)
    params = init_params(kp, KKD, NFB, NDIM, NMID, NUM_ACTIONS)

    boxes_feats = jax.random.normal(kx, (B, T, MAX_N, KKD), jnp.float32)
    box_nums = np.array([[2, 4, 3],
                         [3, 2, 4]], dtype=np.int32)     # box_num_volumn
    key_frames = np.array([1, 1], dtype=np.int32)        # key_frame (N=4 and N=2 paths)

    actions, interactions = forward(params, boxes_feats, box_nums, key_frames)
    jax.block_until_ready((actions, interactions))

    Ns = [int(box_nums[b][int(key_frames[b])]) for b in range(B)]
    assert actions.shape == (sum(Ns), NUM_ACTIONS)
    assert interactions.shape == (sum(n * (n - 1) for n in Ns), 2)

    ref_a, ref_i = _reference_forward(params, np.asarray(boxes_feats),
                                      box_nums, key_frames)
    np.testing.assert_allclose(np.asarray(actions), ref_a, rtol=2e-2, atol=2e-2)
    np.testing.assert_allclose(np.asarray(interactions), ref_i, rtol=2e-2, atol=2e-2)
    print("KERNEL_OK")
</pallas_src>

<mosaic_0001>
module attributes {stable_mosaic.version = 11 : i64} {
  func.func @_emb_kernel(%arg0: i32, %arg1: i32, %arg2: memref<16x128xbf16, #tpu.memory_space<vmem>>, %arg3: memref<128x128xbf16, #tpu.memory_space<vmem>>, %arg4: memref<1x128xf32, #tpu.memory_space<vmem>>, %arg5: memref<128x128xbf16, #tpu.memory_space<vmem>>, %arg6: memref<1x128xf32, #tpu.memory_space<vmem>>, %arg7: memref<128x128xbf16, #tpu.memory_space<vmem>>, %arg8: memref<128x128xbf16, #tpu.memory_space<vmem>>, %arg9: memref<16x128xf32, #tpu.memory_space<vmem>>, %arg10: memref<16x128xf32, #tpu.memory_space<vmem>>, %arg11: memref<16x128xf32, #tpu.memory_space<vmem>>, %arg12: memref<16x128xf32, #tpu.memory_space<vmem>>) attributes {dimension_semantics = [#tpu.dimension_semantics<parallel>, #tpu.dimension_semantics<arbitrary>], iteration_bounds = array<i64: 1, 1>, scalar_prefetch = 0 : i64, scratch_operands = 1 : i64, tpu.core_type = #tpu.core_type<tc>, window_params = [{transform_indices = @transform_0, window_bounds = array<i64: 16, 128>}, {transform_indices = @transform_1, window_bounds = array<i64: 128, 128>}, {pipeline_mode = #tpu.pipeline_mode<synchronous>, transform_indices = @transform_2, window_bounds = array<i64: 1, 128>}, {pipeline_mode = #tpu.pipeline_mode<synchronous>, transform_indices = @transform_3, window_bounds = array<i64: 128, 128>}, {pipeline_mode = #tpu.pipeline_mode<synchronous>, transform_indices = @transform_4, window_bounds = array<i64: 1, 128>}, {pipeline_mode = #tpu.pipeline_mode<synchronous>, transform_indices = @transform_5, window_bounds = array<i64: 128, 128>}, {pipeline_mode = #tpu.pipeline_mode<synchronous>, transform_indices = @transform_6, window_bounds = array<i64: 128, 128>}, {transform_indices = @transform_7, window_bounds = array<i64: 16, 128>}, {transform_indices = @transform_8, window_bounds = array<i64: 16, 128>}, {transform_indices = @transform_9, window_bounds = array<i64: 16, 128>}]} {
    %c0_i32 = arith.constant 0 : i32
    %0 = arith.cmpi eq, %arg1, %c0_i32 : i32
    %1 = arith.extui %0 : i1 to i32
    %c0_i32_0 = arith.constant 0 : i32
    %2 = arith.cmpi ne, %1, %c0_i32_0 : i32
    scf.if %2 {
      %cst_10 = arith.constant 0.000000e+00 : f32
      %12 = vector.broadcast %cst_10 : f32 to vector<16x128xf32>
      %c0_11 = arith.constant 0 : index
      %c0_12 = arith.constant 0 : index
      %13 = vector.load %arg12[%c0_11, %c0_12] : memref<16x128xf32, #tpu.memory_space<vmem>>, vector<16x128xf32>
      tpu.vector_store %arg12[%c0_11, %c0_12], %12 {strides = array<i32>} : memref<16x128xf32, #tpu.memory_space<vmem>>, vector<16x128xf32>,
    } else {
    }
    %c0 = arith.constant 0 : index
    %c0_1 = arith.constant 0 : index
    %3 = vector.load %arg12[%c0, %c0_1] : memref<16x128xf32, #tpu.memory_space<vmem>>, vector<16x128xf32>
    %c0_2 = arith.constant 0 : index
    %c0_3 = arith.constant 0 : index
    %4 = vector.load %arg2[%c0_2, %c0_3] : memref<16x128xbf16, #tpu.memory_space<vmem>>, vector<16x128xbf16>
    %c0_4 = arith.constant 0 : index
    %c0_5 = arith.constant 0 : index
    %5 = vector.load %arg3[%c0_4, %c0_5] : memref<128x128xbf16, #tpu.memory_space<vmem>>, vector<128x128xbf16>
    %cst = arith.constant dense<0.000000e+00> : vector<16x128xf32>
    %6 = tpu.matmul %4, %5, %cst {dimension_numbers = #tpu.dot_dimension_numbers<[1], [0], [0], [1], [0, 0, 1, 1], [], []>} : vector<16x128xbf16>, vector<128x128xbf16>, vector<16x128xf32> -> vector<16x128xf32>
    %7 = arith.addf %3, %6 : vector<16x128xf32>
    %c0_6 = arith.constant 0 : index
    %c0_7 = arith.constant 0 : index
    %8 = vector.load %arg12[%c0_6, %c0_7] : memref<16x128xf32, #tpu.memory_space<vmem>>, vector<16x128xf32>
    tpu.vector_store %arg12[%c0_6, %c0_7], %7 {strides = array<i32>} : memref<16x128xf32, #tpu.memory_space<vmem>>, vector<16x128xf32>,
    %c0_i32_8 = arith.constant 0 : i32
    %9 = arith.cmpi eq, %arg1, %c0_i32_8 : i32
    %10 = arith.extui %9 : i1 to i32
    %c0_i32_9 = arith.constant 0 : i32
    %11 = arith.cmpi ne, %10, %c0_i32_9 : i32
    scf.if %11 {
      %c0_10 = arith.constant 0 : index
      %c0_11 = arith.constant 0 : index
      %12 = vector.load %arg12[%c0_10, %c0_11] : memref<16x128xf32, #tpu.memory_space<vmem>>, vector<16x128xf32>
      %c0_12 = arith.constant 0 : index
      %c0_13 = arith.constant 0 : index
      %13 = vector.load %arg4[%c0_12, %c0_13] : memref<1x128xf32, #tpu.memory_space<vmem>>, vector<1x128xf32>
      %14 = vector.broadcast %13 : vector<1x128xf32> to vector<16x128xf32>
      %15 = arith.addf %12, %14 : vector<16x128xf32>
      %cst_14 = arith.constant 0.000000e+00 : f32
      %16 = vector.broadcast %cst_14 : f32 to vector<16x128xf32>
      %17 = arith.maximumf %15, %16 : vector<16x128xf32>
      %18 = arith.truncf %17 : vector<16x128xf32> to vector<16x128xbf16>
      %c0_15 = arith.constant 0 : index
      %c0_16 = arith.constant 0 : index
      %19 = vector.load %arg5[%c0_15, %c0_16] : memref<128x128xbf16, #tpu.memory_space<vmem>>, vector<128x128xbf16>
      %cst_17 = arith.constant dense<0.000000e+00> : vector<16x128xf32>
      %20 = tpu.matmul %18, %19, %cst_17 {dimension_numbers = #tpu.dot_dimension_numbers<[1], [0], [0], [1], [0, 0, 1, 1], [], []>} : vector<16x128xbf16>, vector<128x128xbf16>, vector<16x128xf32> -> vector<16x128xf32>
      %c0_18 = arith.constant 0 : index
      %c0_19 = arith.constant 0 : index
      %21 = vector.load %arg6[%c0_18, %c0_19] : memref<1x128xf32, #tpu.memory_space<vmem>>, vector<1x128xf32>
      %22 = vector.broadcast %21 : vector<1x128xf32> to vector<16x128xf32>
      %23 = arith.addf %20, %22 : vector<16x128xf32>
      %cst_20 = arith.constant 0.000000e+00 : f32
      %24 = vector.broadcast %cst_20 : f32 to vector<16x128xf32>
      %25 = arith.maximumf %23, %24 : vector<16x128xf32>
      %c0_21 = arith.constant 0 : index
      %c0_22 = arith.constant 0 : index
      %26 = vector.load %arg11[%c0_21, %c0_22] : memref<16x128xf32, #tpu.memory_space<vmem>>, vector<16x128xf32>
      tpu.vector_store %arg11[%c0_21, %c0_22], %25 {strides = array<i32>} : memref<16x128xf32, #tpu.memory_space<vmem>>, vector<16x128xf32>,
      %c0_23 = arith.constant 0 : index
      %c0_24 = arith.constant 0 : index
      %27 = vector.load %arg7[%c0_23, %c0_24] : memref<128x128xbf16, #tpu.memory_space<vmem>>, vector<128x128xbf16>
      %cst_25 = arith.constant dense<0.000000e+00> : vector<16x128xf32>
      %28 = tpu.matmul %18, %27, %cst_25 {dimension_numbers = #tpu.dot_dimension_numbers<[1], [0], [0], [1], [0, 0, 1, 1], [], []>} : vector<16x128xbf16>, vector<128x128xbf16>, vector<16x128xf32> -> vector<16x128xf32>
      %c0_26 = arith.constant 0 : index
      %c0_27 = arith.constant 0 : index
      %29 = vector.load %arg9[%c0_26, %c0_27] : memref<16x128xf32, #tpu.memory_space<vmem>>, vector<16x128xf32>
      tpu.vector_store %arg9[%c0_26, %c0_27], %28 {strides = array<i32>} : memref<16x128xf32, #tpu.memory_space<vmem>>, vector<16x128xf32>,
      %c0_28 = arith.constant 0 : index
      %c0_29 = arith.constant 0 : index
      %30 = vector.load %arg8[%c0_28, %c0_29] : memref<128x128xbf16, #tpu.memory_space<vmem>>, vector<128x128xbf16>
      %cst_30 = arith.constant dense<0.000000e+00> : vector<16x128xf32>
      %31 = tpu.matmul %18, %30, %cst_30 {dimension_numbers = #tpu.dot_dimension_numbers<[1], [0], [0], [1], [0, 0, 1, 1], [], []>} : vector<16x128xbf16>, vector<128x128xbf16>, vector<16x128xf32> -> vector<16x128xf32>
      %c0_31 = arith.constant 0 : index
      %c0_32 = arith.constant 0 : index
      %32 = vector.load %arg10[%c0_31, %c0_32] : memref<16x128xf32, #tpu.memory_space<vmem>>, vector<16x128xf32>
      tpu.vector_store %arg10[%c0_31, %c0_32], %31 {strides = array<i32>} : memref<16x128xf32, #tpu.memory_space<vmem>>, vector<16x128xf32>,
    } else {
    }
    return
  }
  func.func @transform_0(%arg0: i32, %arg1: i32) -> (i32, i32) {
    %c0_i32 = arith.constant 0 : i32
    return %arg0, %arg1 : i32, i32
  }
  func.func @transform_1(%arg0: i32, %arg1: i32) -> (i32, i32) {
    %c0_i32 = arith.constant 0 : i32
    %c0_i32_0 = arith.constant 0 : i32
    return %arg1, %c0_i32 : i32, i32
  }
  func.func @transform_2(%arg0: i32, %arg1: i32) -> (i32, i32) {
    %c0_i32 = arith.constant 0 : i32
    %c0_i32_0 = arith.constant 0 : i32
    %c0_i32_1 = arith.constant 0 : i32
    return %c0_i32, %c0_i32_0 : i32, i32
  }
  func.func @transform_3(%arg0: i32, %arg1: i32) -> (i32, i32) {
    %c0_i32 = arith.constant 0 : i32
    %c0_i32_0 = arith.constant 0 : i32
    %c0_i32_1 = arith.constant 0 : i32
    return %c0_i32, %c0_i32_0 : i32, i32
  }
  func.func @transform_4(%arg0: i32, %arg1: i32) -> (i32, i32) {
    %c0_i32 = arith.constant 0 : i32
    %c0_i32_0 = arith.constant 0 : i32
    %c0_i32_1 = arith.constant 0 : i32
    return %c0_i32, %c0_i32_0 : i32, i32
  }
  func.func @transform_5(%arg0: i32, %arg1: i32) -> (i32, i32) {
    %c0_i32 = arith.constant 0 : i32
    %c0_i32_0 = arith.constant 0 : i32
    %c0_i32_1 = arith.constant 0 : i32
    return %c0_i32, %c0_i32_0 : i32, i32
  }
  func.func @transform_6(%arg0: i32, %arg1: i32) -> (i32, i32) {
    %c0_i32 = arith.constant 0 : i32
    %c0_i32_0 = arith.constant 0 : i32
    %c0_i32_1 = arith.constant 0 : i32
    return %c0_i32, %c0_i32_0 : i32, i32
  }
  func.func @transform_7(%arg0: i32, %arg1: i32) -> (i32, i32) {
    %c0_i32 = arith.constant 0 : i32
    %c0_i32_0 = arith.constant 0 : i32
    return %arg0, %c0_i32 : i32, i32
  }
  func.func @transform_8(%arg0: i32, %arg1: i32) -> (i32, i32) {
    %c0_i32 = arith.constant 0 : i32
    %c0_i32_0 = arith.constant 0 : i32
    return %arg0, %c0_i32 : i32, i32
  }
  func.func @transform_9(%arg0: i32, %arg1: i32) -> (i32, i32) {
    %c0_i32 = arith.constant 0 : i32
    %c0_i32_0 = arith.constant 0 : i32
    return %arg0, %c0_i32 : i32, i32
  }
}

module attributes {stable_mosaic.version = 11 : i64} {
  func.func @_frame_kernel(%arg0: i32, %arg1: memref<2xi32, #tpu.memory_space<smem>>, %arg2: memref<1x8x128xf32, #tpu.memory_space<vmem>>, %arg3: memref<1x8x128xf32, #tpu.memory_space<vmem>>, %arg4: memref<1x8x128xf32, #tpu.memory_space<vmem>>, %arg5: memref<1x16x1xi32, #tpu.memory_space<vmem>>, %arg6: memref<1x16x1xi32, #tpu.memory_space<vmem>>, %arg7: memref<1x8x1xi32, #tpu.memory_space<vmem>>, %arg8: memref<1x16x1xi32, #tpu.memory_space<vmem>>, %arg9: memref<1x128xf32, #tpu.memory_space<vmem>>, %arg10: memref<128x128xf32, #tpu.memory_space<vmem>>, %arg11: memref<1x128xf32, #tpu.memory_space<vmem>>, %arg12: memref<1x128xf32, #tpu.memory_space<vmem>>, %arg13: memref<1x128xf32, #tpu.memory_space<vmem>>, %arg14: memref<128x128xf32, #tpu.memory_space<vmem>>, %arg15: memref<1x128xf32, #tpu.memory_space<vmem>>, %arg16: memref<128x128xf32, #tpu.memory_space<vmem>>, %arg17: memref<1x128xf32, #tpu.memory_space<vmem>>, %arg18: memref<1x8x128xf32, #tpu.memory_space<vmem>>, %arg19: memref<1x16x128xf32, #tpu.memory_space<vmem>>) attributes {dimension_semantics = [#tpu.dimension_semantics<parallel>], iteration_bounds = array<i64: 2>, scalar_prefetch = 1 : i64, scratch_operands = 0 : i64, tpu.core_type = #tpu.core_type<tc>, window_params = [{transform_indices = @transform_0, window_bounds = array<i64: 1, 8, 128>}, {transform_indices = @transform_1, window_bounds = array<i64: 1, 8, 128>}, {transform_indices = @transform_2, window_bounds = array<i64: 1, 8, 128>}, {transform_indices = @transform_3, window_bounds = array<i64: 1, 16, 1>}, {transform_indices = @transform_4, window_bounds = array<i64: 1, 16, 1>}, {transform_indices = @transform_5, window_bounds = array<i64: 1, 8, 1>}, {transform_indices = @transform_6, window_bounds = array<i64: 1, 16, 1>}, {pipeline_mode = #tpu.pipeline_mode<synchronous>, transform_indices = @transform_7, window_bounds = array<i64: 1, 128>}, {pipeline_mode = #tpu.pipeline_mode<synchronous>, transform_indices = @transform_8, window_bounds = array<i64: 128, 128>}, {pipeline_mode = #tpu.pipeline_mode<synchronous>, transform_indices = @transform_9, window_bounds = array<i64: 1, 128>}, {pipeline_mode = #tpu.pipeline_mode<synchronous>, transform_indices = @transform_10, window_bounds = array<i64: 1, 128>}, {pipeline_mode = #tpu.pipeline_mode<synchronous>, transform_indices = @transform_11, window_bounds = array<i64: 1, 128>}, {pipeline_mode = #tpu.pipeline_mode<synchronous>, transform_indices = @transform_12, window_bounds = array<i64: 128, 128>}, {pipeline_mode = #tpu.pipeline_mode<synchronous>, transform_indices = @transform_13, window_bounds = array<i64: 1, 128>}, {pipeline_mode = #tpu.pipeline_mode<synchronous>, transform_indices = @transform_14, window_bounds = array<i64: 128, 128>}, {pipeline_mode = #tpu.pipeline_mode<synchronous>, transform_indices = @transform_15, window_bounds = array<i64: 1, 128>}, {transform_indices = @transform_16, window_bounds = array<i64: 1, 8, 128>}, {transform_indices = @transform_17, window_bounds = array<i64: 1, 16, 128>}]} {
    %c0 = arith.constant 0 : index
    %c0_0 = arith.constant 0 : index
    %c0_1 = arith.constant 0 : index
    %0 = vector.load %arg2[%c0, %c0_0, %c0_1] : memref<1x8x128xf32, #tpu.memory_space<vmem>>, vector<1x8x128xf32>
    %1 = vector.shape_cast %0 : vector<1x8x128xf32> to vector<8x128xf32>
    %c0_2 = arith.constant 0 : index
    %c0_3 = arith.constant 0 : index
    %c0_4 = arith.constant 0 : index
    %2 = vector.load %arg3[%c0_2, %c0_3, %c0_4] : memref<1x8x128xf32, #tpu.memory_space<vmem>>, vector<1x8x128xf32>
    %3 = vector.shape_cast %2 : vector<1x8x128xf32> to vector<8x128xf32>
    %c0_5 = arith.constant 0 : index
    %c0_6 = arith.constant 0 : index
    %c0_7 = arith.constant 0 : index
    %4 = vector.load %arg4[%c0_5, %c0_6, %c0_7] : memref<1x8x128xf32, #tpu.memory_space<vmem>>, vector<1x8x128xf32>
    %5 = vector.shape_cast %4 : vector<1x8x128xf32> to vector<8x128xf32>
    %6 = tpu.iota {dimensions = array<i32: 1>} : vector<16x8xi32>
    %c0_8 = arith.constant 0 : index
    %c0_9 = arith.constant 0 : index
    %c0_10 = arith.constant 0 : index
    %7 = vector.load %arg5[%c0_8, %c0_9, %c0_10] : memref<1x16x1xi32, #tpu.memory_space<vmem>>, vector<1x16x1xi32>
    %8 = vector.shape_cast %7 : vector<1x16x1xi32> to vector<16x1xi32>
    %9 = vector.broadcast %8 : vector<16x1xi32> to vector<16x8xi32>
    %10 = arith.cmpi eq, %6, %9 : vector<16x8xi32>
    %11 = arith.extui %10 : vector<16x8xi1> to vector<16x8xi32>
    %12 = arith.sitofp %11 : vector<16x8xi32> to vector<16x8xf32>
    %c0_11 = arith.constant 0 : index
    %c0_12 = arith.constant 0 : index
    %c0_13 = arith.constant 0 : index
    %13 = vector.load %arg6[%c0_11, %c0_12, %c0_13] : memref<1x16x1xi32, #tpu.memory_space<vmem>>, vector<1x16x1xi32>
    %14 = vector.shape_cast %13 : vector<1x16x1xi32> to vector<16x1xi32>
    %15 = vector.broadcast %14 : vector<16x1xi32> to vector<16x8xi32>
    %16 = arith.cmpi eq, %6, %15 : vector<16x8xi32>
    %17 = arith.extui %16 : vector<16x8xi1> to vector<16x8xi32>
    %18 = arith.sitofp %17 : vector<16x8xi32> to vector<16x8xf32>
    %cst = arith.constant dense<0.000000e+00> : vector<16x128xf32>
    %19 = tpu.matmul %12, %1, %cst {dimension_numbers = #tpu.dot_dimension_numbers<[1], [0], [0], [1], [0, 0, 1, 1], [], []>} : vector<16x8xf32>, vector<8x128xf32>, vector<16x128xf32> -> vector<16x128xf32>
    %cst_14 = arith.constant dense<0.000000e+00> : vector<16x128xf32>
    %20 = tpu.matmul %18, %3, %cst_14 {dimension_numbers = #tpu.dot_dimension_numbers<[1], [0], [0], [1], [0, 0, 1, 1], [], []>} : vector<16x8xf32>, vector<8x128xf32>, vector<16x128xf32> -> vector<16x128xf32>
    %21 = arith.addf %19, %20 : vector<16x128xf32>
    %c0_15 = arith.constant 0 : index
    %c0_16 = arith.constant 0 : index
    %22 = vector.load %arg9[%c0_15, %c0_16] : memref<1x128xf32, #tpu.memory_space<vmem>>, vector<1x128xf32>
    %23 = vector.broadcast %22 : vector<1x128xf32> to vector<16x128xf32>
    %24 = arith.addf %21, %23 : vector<16x128xf32>
    %cst_17 = arith.constant 0.000000e+00 : f32
    %25 = vector.broadcast %cst_17 : f32 to vector<16x128xf32>
    %26 = arith.maximumf %24, %25 : vector<16x128xf32>
    %27 = tpu.iota {dimensions = array<i32: 1>} : vector<8x16xi32>
    %c0_18 = arith.constant 0 : index
    %c0_19 = arith.constant 0 : index
    %c0_20 = arith.constant 0 : index
    %28 = vector.load %arg7[%c0_18, %c0_19, %c0_20] : memref<1x8x1xi32, #tpu.memory_space<vmem>>, vector<1x8x1xi32>
    %29 = vector.shape_cast %28 : vector<1x8x1xi32> to vector<8x1xi32>
    %30 = vector.broadcast %29 : vector<8x1xi32> to vector<8x16xi32>
    %31 = arith.cmpi eq, %27, %30 : vector<8x16xi32>
    %32 = arith.extui %31 : vector<8x16xi1> to vector<8x16xi32>
    %33 = arith.sitofp %32 : vector<8x16xi32> to vector<8x16xf32>
    %cst_21 = arith.constant dense<0.000000e+00> : vector<8x128xf32>
    %34 = tpu.matmul %33, %26, %cst_21 {dimension_numbers = #tpu.dot_dimension_numbers<[1], [0], [0], [1], [0, 0, 1, 1], [], []>} : vector<8x16xf32>, vector<16x128xf32>, vector<8x128xf32> -> vector<8x128xf32>
    %35 = arith.index_cast %arg0 : i32 to index
    %36 = memref.load %arg1[%35] : memref<2xi32, #tpu.memory_space<smem>>
    %c0_i32 = arith.constant 0 : i32
    %37 = arith.cmpi sgt, %36, %c0_i32 : i32
    %38 = arith.extui %37 : i1 to i32
    %39 = arith.sitofp %38 : i32 to f32
    %cst_22 = arith.constant 2.000000e+00 : f32
    %40 = arith.addf %cst_22, %39 : f32
    %41 = vector.broadcast %40 : f32 to vector<8x128xf32>
    %42 = arith.mulf %41, %5 : vector<8x128xf32>
    %c0_23 = arith.constant 0 : index
    %c0_24 = arith.constant 0 : index
    %43 = vector.load %arg10[%c0_23, %c0_24] : memref<128x128xf32, #tpu.memory_space<vmem>>, vector<128x128xf32>
    %cst_25 = arith.constant dense<0.000000e+00> : vector<8x128xf32>
    %44 = tpu.matmul %42, %43, %cst_25 {dimension_numbers = #tpu.dot_dimension_numbers<[1], [0], [0], [1], [0, 0, 1, 1], [], []>} : vector<8x128xf32>, vector<128x128xf32>, vector<8x128xf32> -> vector<8x128xf32>
    %c0_26 = arith.constant 0 : index
    %c0_27 = arith.constant 0 : index
    %45 = vector.load %arg11[%c0_26, %c0_27] : memref<1x128xf32, #tpu.memory_space<vmem>>, vector<1x128xf32>
    %46 = vector.broadcast %45 : vector<1x128xf32> to vector<8x128xf32>
    %47 = arith.addf %44, %46 : vector<8x128xf32>
    %48 = tpu.iota {dimensions = array<i32: 1>} : vector<1x128xi32>
    %c64_i32 = arith.constant 64 : i32
    %49 = vector.broadcast %c64_i32 : i32 to vector<1x128xi32>
    %50 = arith.cmpi slt, %48, %49 : vector<1x128xi32>
    %51 = arith.extui %50 : vector<1x128xi1> to vector<1x128xi32>
    %52 = arith.sitofp %51 : vector<1x128xi32> to vector<1x128xf32>
    %53 = vector.broadcast %52 : vector<1x128xf32> to vector<8x128xf32>
    %54 = arith.mulf %47, %53 : vector<8x128xf32>
    %cst_28 = arith.constant dense<0.000000e+00> : vector<8xf32>
    %55 = vector.multi_reduction <add>, %54, %cst_28 [1] : vector<8x128xf32> to vector<8xf32>
    %56 = vector.shape_cast %55 : vector<8xf32> to vector<8x1xf32>
    %cst_29 = arith.constant 1.562500e-02 : f32
    %57 = vector.broadcast %cst_29 : f32 to vector<8x1xf32>
    %58 = arith.mulf %56, %57 : vector<8x1xf32>
    %59 = vector.broadcast %58 : vector<8x1xf32> to vector<8x128xf32>
    %60 = arith.subf %47, %59 : vector<8x128xf32>
    %61 = vector.broadcast %52 : vector<1x128xf32> to vector<8x128xf32>
    %62 = arith.mulf %60, %61 : vector<8x128xf32>
    %63 = arith.mulf %62, %62 : vector<8x128xf32>
    %cst_30 = arith.constant dense<0.000000e+00> : vector<8xf32>
    %64 = vector.multi_reduction <add>, %63, %cst_30 [1] : vector<8x128xf32> to vector<8xf32>
    %65 = vector.shape_cast %64 : vector<8xf32> to vector<8x1xf32>
    %cst_31 = arith.constant 1.562500e-02 : f32
    %66 = vector.broadcast %cst_31 : f32 to vector<8x1xf32>
    %67 = arith.mulf %65, %66 : vector<8x1xf32>
    %cst_32 = arith.constant 9.99999974E-6 : f32
    %68 = vector.broadcast %cst_32 : f32 to vector<8x1xf32>
    %69 = arith.addf %67, %68 : vector<8x1xf32>
    %70 = math.rsqrt %69 : vector<8x1xf32>
    %71 = vector.broadcast %70 : vector<8x1xf32> to vector<8x128xf32>
    %72 = arith.mulf %62, %71 : vector<8x128xf32>
    %c0_33 = arith.constant 0 : index
    %c0_34 = arith.constant 0 : index
    %73 = vector.load %arg12[%c0_33, %c0_34] : memref<1x128xf32, #tpu.memory_space<vmem>>, vector<1x128xf32>
    %74 = vector.broadcast %73 : vector<1x128xf32> to vector<8x128xf32>
    %75 = arith.mulf %72, %74 : vector<8x128xf32>
    %c0_35 = arith.constant 0 : index
    %c0_36 = arith.constant 0 : index
    %76 = vector.load %arg13[%c0_35, %c0_36] : memref<1x128xf32, #tpu.memory_space<vmem>>, vector<1x128xf32>
    %77 = vector.broadcast %76 : vector<1x128xf32> to vector<8x128xf32>
    %78 = arith.addf %75, %77 : vector<8x128xf32>
    %cst_37 = arith.constant 0.000000e+00 : f32
    %79 = vector.broadcast %cst_37 : f32 to vector<8x128xf32>
    %80 = arith.maximumf %78, %79 : vector<8x128xf32>
    %c0_38 = arith.constant 0 : index
    %c0_39 = arith.constant 0 : index
    %81 = vector.load %arg14[%c0_38, %c0_39] : memref<128x128xf32, #tpu.memory_space<vmem>>, vector<128x128xf32>
    %cst_40 = arith.constant dense<0.000000e+00> : vector<8x128xf32>
    %82 = tpu.matmul %80, %81, %cst_40 {dimension_numbers = #tpu.dot_dimension_numbers<[1], [0], [0], [1], [0, 0, 1, 1], [], []>} : vector<8x128xf32>, vector<128x128xf32>, vector<8x128xf32> -> vector<8x128xf32>
    %c0_41 = arith.constant 0 : index
    %c0_42 = arith.constant 0 : index
    %83 = vector.load %arg15[%c0_41, %c0_42] : memref<1x128xf32, #tpu.memory_space<vmem>>, vector<1x128xf32>
    %84 = vector.broadcast %83 : vector<1x128xf32> to vector<8x128xf32>
    %85 = arith.addf %82, %84 : vector<8x128xf32>
    %c0_43 = arith.constant 0 : index
    %c0_44 = arith.constant 0 : index
    %c0_45 = arith.constant 0 : index
    %86 = vector.load %arg18[%c0_43, %c0_44, %c0_45] : memref<1x8x128xf32, #tpu.memory_space<vmem>>, vector<1x8x128xf32>
    %87 = vector.shape_cast %86 : vector<1x8x128xf32> to vector<8x128xf32>
    %88 = vector.shape_cast %85 : vector<8x128xf32> to vector<1x8x128xf32>
    tpu.vector_store %arg18[%c0_43, %c0_44, %c0_45], %88 {strides = array<i32>} : memref<1x8x128xf32, #tpu.memory_space<vmem>>, vector<1x8x128xf32>,
    %89 = tpu.iota {dimensions = array<i32: 1>} : vector<16x8xi32>
    %c0_46 = arith.constant 0 : index
    %c0_47 = arith.constant 0 : index
    %c0_48 = arith.constant 0 : index
    %90 = vector.load %arg8[%c0_46, %c0_47, %c0_48] : memref<1x16x1xi32, #tpu.memory_space<vmem>>, vector<1x16x1xi32>
    %91 = vector.shape_cast %90 : vector<1x16x1xi32> to vector<16x1xi32>
    %92 = vector.broadcast %91 : vector<16x1xi32> to vector<16x8xi32>
    %93 = arith.cmpi eq, %89, %92 : vector<16x8xi32>
    %94 = arith.extui %93 : vector<16x8xi1> to vector<16x8xi32>
    %95 = arith.sitofp %94 : vector<16x8xi32> to vector<16x8xf32>
    %cst_49 = arith.constant dense<0.000000e+00> : vector<16x128xf32>
    %96 = tpu.matmul %95, %34, %cst_49 {dimension_numbers = #tpu.dot_dimension_numbers<[1], [0], [0], [1], [0, 0, 1, 1], [], []>} : vector<16x8xf32>, vector<8x128xf32>, vector<16x128xf32> -> vector<16x128xf32>
    %97 = vector.broadcast %39 : f32 to vector<16x128xf32>
    %98 = arith.mulf %97, %96 : vector<16x128xf32>
    %cst_50 = arith.constant 1.000000e+00 : f32
    %99 = arith.subf %cst_50, %39 : f32
    %100 = vector.broadcast %99 : f32 to vector<16x128xf32>
    %101 = arith.mulf %100, %26 : vector<16x128xf32>
    %102 = arith.addf %98, %101 : vector<16x128xf32>
    %c0_51 = arith.constant 0 : index
    %c0_52 = arith.constant 0 : index
    %103 = vector.load %arg16[%c0_51, %c0_52] : memref<128x128xf32, #tpu.memory_space<vmem>>, vector<128x128xf32>
    %cst_53 = arith.constant dense<0.000000e+00> : vector<16x128xf32>
    %104 = tpu.matmul %102, %103, %cst_53 {dimension_numbers = #tpu.dot_dimension_numbers<[1], [0], [0], [1], [0, 0, 1, 1], [], []>} : vector<16x128xf32>, vector<128x128xf32>, vector<16x128xf32> -> vector<16x128xf32>
    %c0_54 = arith.constant 0 : index
    %c0_55 = arith.constant 0 : index
    %105 = vector.load %arg17[%c0_54, %c0_55] : memref<1x128xf32, #tpu.memory_space<vmem>>, vector<1x128xf32>
    %106 = vector.broadcast %105 : vector<1x128xf32> to vector<16x128xf32>
    %107 = arith.addf %104, %106 : vector<16x128xf32>
    %c0_56 = arith.constant 0 : index
    %c0_57 = arith.constant 0 : index
    %c0_58 = arith.constant 0 : index
    %108 = vector.load %arg19[%c0_56, %c0_57, %c0_58] : memref<1x16x128xf32, #tpu.memory_space<vmem>>, vector<1x16x128xf32>
    %109 = vector.shape_cast %108 : vector<1x16x128xf32> to vector<16x128xf32>
    %110 = vector.shape_cast %107 : vector<16x128xf32> to vector<1x16x128xf32>
    tpu.vector_store %arg19[%c0_56, %c0_57, %c0_58], %110 {strides = array<i32>} : memref<1x16x128xf32, #tpu.memory_space<vmem>>, vector<1x16x128xf32>,
    return
  }
  func.func @transform_0(%arg0: i32, %arg1: memref<2xi32, #tpu.memory_space<smem>>) -> (i32, i32, i32) {
    %c0_i32 = arith.constant 0 : i32
    %c0_i32_0 = arith.constant 0 : i32
    %c0_i32_1 = arith.constant 0 : i32
    return %arg0, %c0_i32, %c0_i32_0 : i32, i32, i32
  }
  func.func @transform_1(%arg0: i32, %arg1: memref<2xi32, #tpu.memory_space<smem>>) -> (i32, i32, i32) {
    %c0_i32 = arith.constant 0 : i32
    %c0_i32_0 = arith.constant 0 : i32
    %c0_i32_1 = arith.constant 0 : i32
    return %arg0, %c0_i32, %c0_i32_0 : i32, i32, i32
  }
  func.func @transform_2(%arg0: i32, %arg1: memref<2xi32, #tpu.memory_space<smem>>) -> (i32, i32, i32) {
    %c0_i32 = arith.constant 0 : i32
    %c0_i32_0 = arith.constant 0 : i32
    %c0_i32_1 = arith.constant 0 : i32
    return %arg0, %c0_i32, %c0_i32_0 : i32, i32, i32
  }
  func.func @transform_3(%arg0: i32, %arg1: memref<2xi32, #tpu.memory_space<smem>>) -> (i32, i32, i32) {
    %c0_i32 = arith.constant 0 : i32
    %c0_i32_0 = arith.constant 0 : i32
    %c0_i32_1 = arith.constant 0 : i32
    return %arg0, %c0_i32, %c0_i32_0 : i32, i32, i32
  }
  func.func @transform_4(%arg0: i32, %arg1: memref<2xi32, #tpu.memory_space<smem>>) -> (i32, i32, i32) {
    %c0_i32 = arith.constant 0 : i32
    %c0_i32_0 = arith.constant 0 : i32
    %c0_i32_1 = arith.constant 0 : i32
    return %arg0, %c0_i32, %c0_i32_0 : i32, i32, i32
  }
  func.func @transform_5(%arg0: i32, %arg1: memref<2xi32, #tpu.memory_space<smem>>) -> (i32, i32, i32) {
    %c0_i32 = arith.constant 0 : i32
    %c0_i32_0 = arith.constant 0 : i32
    %c0_i32_1 = arith.constant 0 : i32
    return %arg0, %c0_i32, %c0_i32_0 : i32, i32, i32
  }
  func.func @transform_6(%arg0: i32, %arg1: memref<2xi32, #tpu.memory_space<smem>>) -> (i32, i32, i32) {
    %c0_i32 = arith.constant 0 : i32
    %c0_i32_0 = arith.constant 0 : i32
    %c0_i32_1 = arith.constant 0 : i32
    return %arg0, %c0_i32, %c0_i32_0 : i32, i32, i32
  }
  func.func @transform_7(%arg0: i32, %arg1: memref<2xi32, #tpu.memory_space<smem>>) -> (i32, i32) {
    %c0_i32 = arith.constant 0 : i32
    %c0_i32_0 = arith.constant 0 : i32
    %c0_i32_1 = arith.constant 0 : i32
    return %c0_i32, %c0_i32_0 : i32, i32
  }
  func.func @transform_8(%arg0: i32, %arg1: memref<2xi32, #tpu.memory_space<smem>>) -> (i32, i32) {
    %c0_i32 = arith.constant 0 : i32
    %c0_i32_0 = arith.constant 0 : i32
    %c0_i32_1 = arith.constant 0 : i32
    return %c0_i32, %c0_i32_0 : i32, i32
  }
  func.func @transform_9(%arg0: i32, %arg1: memref<2xi32, #tpu.memory_space<smem>>) -> (i32, i32) {
    %c0_i32 = arith.constant 0 : i32
    %c0_i32_0 = arith.constant 0 : i32
    %c0_i32_1 = arith.constant 0 : i32
    return %c0_i32, %c0_i32_0 : i32, i32
  }
  func.func @transform_10(%arg0: i32, %arg1: memref<2xi32, #tpu.memory_space<smem>>) -> (i32, i32) {
    %c0_i32 = arith.constant 0 : i32
    %c0_i32_0 = arith.constant 0 : i32
    %c0_i32_1 = arith.constant 0 : i32
    return %c0_i32, %c0_i32_0 : i32, i32
  }
  func.func @transform_11(%arg0: i32, %arg1: memref<2xi32, #tpu.memory_space<smem>>) -> (i32, i32) {
    %c0_i32 = arith.constant 0 : i32
    %c0_i32_0 = arith.constant 0 : i32
    %c0_i32_1 = arith.constant 0 : i32
    return %c0_i32, %c0_i32_0 : i32, i32
  }
  func.func @transform_12(%arg0: i32, %arg1: memref<2xi32, #tpu.memory_space<smem>>) -> (i32, i32) {
    %c0_i32 = arith.constant 0 : i32
    %c0_i32_0 = arith.constant 0 : i32
    %c0_i32_1 = arith.constant 0 : i32
    return %c0_i32, %c0_i32_0 : i32, i32
  }
  func.func @transform_13(%arg0: i32, %arg1: memref<2xi32, #tpu.memory_space<smem>>) -> (i32, i32) {
    %c0_i32 = arith.constant 0 : i32
    %c0_i32_0 = arith.constant 0 : i32
    %c0_i32_1 = arith.constant 0 : i32
    return %c0_i32, %c0_i32_0 : i32, i32
  }
  func.func @transform_14(%arg0: i32, %arg1: memref<2xi32, #tpu.memory_space<smem>>) -> (i32, i32) {
    %c0_i32 = arith.constant 0 : i32
    %c0_i32_0 = arith.constant 0 : i32
    %c0_i32_1 = arith.constant 0 : i32
    return %c0_i32, %c0_i32_0 : i32, i32
  }
  func.func @transform_15(%arg0: i32, %arg1: memref<2xi32, #tpu.memory_space<smem>>) -> (i32, i32) {
    %c0_i32 = arith.constant 0 : i32
    %c0_i32_0 = arith.constant 0 : i32
    %c0_i32_1 = arith.constant 0 : i32
    return %c0_i32, %c0_i32_0 : i32, i32
  }
  func.func @transform_16(%arg0: i32, %arg1: memref<2xi32, #tpu.memory_space<smem>>) -> (i32, i32, i32) {
    %c0_i32 = arith.constant 0 : i32
    %c0_i32_0 = arith.constant 0 : i32
    %c0_i32_1 = arith.constant 0 : i32
    return %arg0, %c0_i32, %c0_i32_0 : i32, i32, i32
  }
  func.func @transform_17(%arg0: i32, %arg1: memref<2xi32, #tpu.memory_space<smem>>) -> (i32, i32, i32) {
    %c0_i32 = arith.constant 0 : i32
    %c0_i32_0 = arith.constant 0 : i32
    %c0_i32_1 = arith.constant 0 : i32
    return %arg0, %c0_i32, %c0_i32_0 : i32, i32, i32
  }
}

</mosaic_0001>

<llo_original>
// kernel: _forward_core.2
$region0: #{_forward_core.2}
  #allocation0 [shape = 'u32[]', space=smem, size = 0x4, offset = 0x4, fixed_abs, tag = 'smem constant byte address 0x4 - core index']
  #allocation1 [shape = 'u32[144,128]{1,0:T(1,128)}', space=vmem, size = 0x12000, scoped, tag = 'internal scratch']
  #allocation2 [shape = 'f32[16,128]{1,0:T(8,128)}', space=vmem, size = 0x2000, scoped, tag = 'scratch operand']
  %s0 = inlined_call_operand.vmem [shape: bf16[16,128], index: 0, kind: input, shape index: {}]
  %s1 = inlined_call_operand.vmem [shape: bf16[128,128], index: 1, kind: input, shape index: {}]
  %s2 = inlined_call_operand.vmem [shape: f32[1,128], index: 2, kind: input, shape index: {}]
  %s3 = inlined_call_operand.vmem [shape: bf16[128,128], index: 3, kind: input, shape index: {}]
  %s4 = inlined_call_operand.vmem [shape: f32[1,128], index: 4, kind: input, shape index: {}]
  %s5 = inlined_call_operand.vmem [shape: bf16[128,128], index: 5, kind: input, shape index: {}]
  %s6 = inlined_call_operand.vmem [shape: bf16[128,128], index: 6, kind: input, shape index: {}]
  %s7 = inlined_call_operand.vmem [shape: f32[16,128], index: 7, kind: output, shape index: {0}]
  %s8 = inlined_call_operand.vmem [shape: f32[16,128], index: 8, kind: output, shape index: {1}]
  %s9 = inlined_call_operand.vmem [shape: f32[16,128], index: 9, kind: output, shape index: {2}]
  %10 = xla_tuple %s7, %s8, %s9
  %s11 = sld [smem:[#allocation0]]
  $region62: #{_forward_core.2} parent=0
    _
  %s13 = ssub.s32 1, %s11
  %s14 = scalar_select 0, %s13, %s11
  // Predicated region
  $region2: #{_forward_core.2} parent=0 // pred_check
    _
  $region3: #{_forward_core.2} parent=0 // pred_check_branch
    %16 = sbr.rel (0) target = $region5
  $region4: #{_forward_core.2} parent=0 // pred_region
    _
  $region5: #{_forward_core.2} parent=0 // pred_fallthru
    _
  // Predicated region
  $region6: #{_forward_core.2} parent=0 // pred_check
    _
  $region7: #{_forward_core.2} parent=0 // pred_check_branch
    %18 = sbr.rel (0) target = $region9
  $region8: #{_forward_core.2} parent=0 // pred_region
    _
  $region9: #{_forward_core.2} parent=0 // pred_fallthru
    _
  // Predicated region
  $region10: #{_forward_core.2} parent=0 // pred_check
    _
  $region11: #{_forward_core.2} parent=0 // pred_check_branch
    %20 = sbr.rel (0) target = $region13
  $region12: #{_forward_core.2} parent=0 // pred_region
    _
  $region13: #{_forward_core.2} parent=0 // pred_fallthru
    _
  // Predicated region
  $region14: #{_forward_core.2} parent=0 // pred_check
    _
  $region15: #{_forward_core.2} parent=0 // pred_check_branch
    %22 = sbr.rel (0) target = $region17
  $region16: #{_forward_core.2} parent=0 // pred_region
    _
  $region17: #{_forward_core.2} parent=0 // pred_fallthru
    _
  // Predicated region
  $region18: #{_forward_core.2} parent=0 // pred_check
    _
  $region19: #{_forward_core.2} parent=0 // pred_check_branch
    %24 = sbr.rel (0) target = $region21
  $region20: #{_forward_core.2} parent=0 // pred_region
    _
  $region21: #{_forward_core.2} parent=0 // pred_fallthru
    _
  // Predicated region
  $region22: #{_forward_core.2} parent=0 // pred_check
    _
  $region23: #{_forward_core.2} parent=0 // pred_check_branch
    %26 = sbr.rel (0) target = $region25
  $region24: #{_forward_core.2} parent=0 // pred_region
    _
  $region25: #{_forward_core.2} parent=0 // pred_fallthru
    _
  // Predicated region
  $region26: #{_forward_core.2} parent=0 // pred_check
    _
  $region27: #{_forward_core.2} parent=0 // pred_check_branch
    %28 = sbr.rel (0) target = $region29
  $region28: #{_forward_core.2} parent=0 // pred_region
    _
  $region29: #{_forward_core.2} parent=0 // pred_fallthru
    _
  %p30 = scmp.eq.s32.totalorder 0, 0
  // Predicated region
  $region30: #{_forward_core.2} parent=0 // pred_check
    %p31 = pneg %p30
  $region31: #{_forward_core.2} parent=0 // pred_check_branch
    %33 = sbr.rel (%p31) target = $region33
  $region32: #{_forward_core.2} parent=0 // pred_region
    %34 = vst [vmem:[#allocation2] sm:$0xff] 0.0
    %35 = vst [vmem:[#allocation2 + $0x8] sm:$0xff] 0.0
  $region33: #{_forward_core.2} parent=0 // pred_fallthru
    _
  %v36 = vld [vmem:[#allocation2] sm:$0xff]
  %v37 = vld [vmem:[#allocation2 + $0x8] sm:$0xff]
  %v38 = vld [vmem:[%s0] sm:$0xf]
  %v39 = vld [vmem:[%s0 + $0x4] sm:$0xf]
  %v40 = vld [vmem:[%s1] sm:$0xf]
  %v41 = vld [vmem:[%s1 + $0x4] sm:$0xf]
  %v42 = vld [vmem:[%s1 + $0x8] sm:$0xf]
  %v43 = vld [vmem:[%s1 + $0xc] sm:$0xf]
  %v44 = vld [vmem:[%s1 + $0x10] sm:$0xf]
  %v45 = vld [vmem:[%s1 + $0x14] sm:$0xf]
  %v46 = vld [vmem:[%s1 + $0x18] sm:$0xf]
  %v47 = vld [vmem:[%s1 + $0x1c] sm:$0xf]
  %v48 = vld [vmem:[%s1 + $0x20] sm:$0xf]
  %v49 = vld [vmem:[%s1 + $0x24] sm:$0xf]
  %v50 = vld [vmem:[%s1 + $0x28] sm:$0xf]
  %v51 = vld [vmem:[%s1 + $0x2c] sm:$0xf]
  %v52 = vld [vmem:[%s1 + $0x30] sm:$0xf]
  %v53 = vld [vmem:[%s1 + $0x34] sm:$0xf]
  %v54 = vld [vmem:[%s1 + $0x38] sm:$0xf]
  %v55 = vld [vmem:[%s1 + $0x3c] sm:$0xf]
  %v58 = vunpack.c.l.b16 %v38
  %v59 = vunpack.c.l.b16 %v39
  %v60 = vpack.c.b16 %v59, %v58
  %v78 = vunpack.c.l.b16 %v40
  %v79 = vunpack.c.l.b16 %v41
  %v80 = vunpack.c.l.b16 %v42
  %v81 = vunpack.c.l.b16 %v43
  %v82 = vunpack.c.l.b16 %v44
  %v83 = vunpack.c.l.b16 %v45
  %v84 = vunpack.c.l.b16 %v46
  %v85 = vunpack.c.l.b16 %v47
  %v86 = vunpack.c.l.b16 %v48
  %v87 = vunpack.c.l.b16 %v49
  %v88 = vunpack.c.l.b16 %v50
  %v89 = vunpack.c.l.b16 %v51
  %v90 = vunpack.c.l.b16 %v52
  %v91 = vunpack.c.l.b16 %v53
  %v92 = vunpack.c.l.b16 %v54
  %v93 = vunpack.c.l.b16 %v55
  %v94 = vpack.c.b16 %v79, %v78
  %v95 = vpack.c.b16 %v81, %v80
  %v96 = vpack.c.b16 %v83, %v82
  %v97 = vpack.c.b16 %v85, %v84
  %v98 = vpack.c.b16 %v87, %v86
  %v99 = vpack.c.b16 %v89, %v88
  %v100 = vpack.c.b16 %v91, %v90
  %v101 = vpack.c.b16 %v93, %v92
  %110 = vmatprep.subr.bf16.mxu0 0
  %111 = vmatpush1.bf16.msra.mxu0 %v94
  %112 = vmatprep.subr.bf16.mxu0 0
  %113 = vmatpush1.bf16.msra.mxu0 %v95
  %114 = vmatprep.subr.bf16.mxu0 0
  %115 = vmatpush1.bf16.msra.mxu0 %v96
  %116 = vmatprep.subr.bf16.mxu0 0
  %117 = vmatpush1.bf16.msra.mxu0 %v97
  %118 = vmatprep.subr.bf16.mxu0 0
  %119 = vmatpush1.bf16.msra.mxu0 %v98
  %120 = vmatprep.subr.bf16.mxu0 0
  %121 = vmatpush1.bf16.msra.mxu0 %v99
  %122 = vmatprep.subr.bf16.mxu0 0
  %123 = vmatpush1.bf16.msra.mxu0 %v100
  %124 = vmatprep.subr.bf16.mxu0 0
  %125 = vmatpush1.bf16.msra.mxu0 %v101
  %126 = vmatprep.subr.bf16.mxu0 0
  %127 = vmatpush1.bf16.msra.mxu0 0
  %128 = vmatprep.subr.bf16.mxu0 0
  %129 = vmatpush1.bf16.msra.mxu0 0
  %130 = vmatprep.subr.bf16.mxu0 0
  %131 = vmatpush1.bf16.msra.mxu0 0
  %132 = vmatprep.subr.bf16.mxu0 0
  %133 = vmatpush1.bf16.msra.mxu0 0
  %134 = vmatprep.subr.bf16.mxu0 0
  %135 = vmatpush1.bf16.msra.mxu0 0
  %136 = vmatprep.subr.bf16.mxu0 0
  %137 = vmatpush1.bf16.msra.mxu0 0
  %138 = vmatprep.subr.bf16.mxu0 0
  %139 = vmatpush1.bf16.msra.mxu0 0
  %140 = vmatprep.subr.bf16.mxu0 0
  %141 = vmatpush1.bf16.msra.mxu0 0
  %142 = vmatprep.mubr.bf16.mxu0 0
  %143 = vmatmul.mubr.bf16.gmra.mrb[0].mxu0 %v60
  %v144 = vpop.f32.mrb[0].mxu0
  %v145 = vadd.f32 0.0, %v144
  %v146 = vpop.f32.mrb[0].mxu0
  %v147 = vpop.f32.mrb[0].mxu0
  %v148 = vadd.f32 0.0, %v147
  %v149 = vpop.f32.mrb[0].mxu0
  %150 = vdwg.mxu0
  %v151 = vadd.f32 %v36, %v145
  %v152 = vadd.f32 %v37, %v148
  %153 = vst [vmem:[#allocation2] sm:$0xff] %v151
  %154 = vst [vmem:[#allocation2 + $0x8] sm:$0xff] %v152
  // Predicated region
  $region34: #{_forward_core.2} parent=0 // pred_check
    %p155 = pneg %p30
  $region35: #{_forward_core.2} parent=0 // pred_check_branch
    %157 = sbr.rel (%p155) target = $region37
  $region36: #{_forward_core.2} parent=0 // pred_region
    %v158 = vld [vmem:[#allocation2] sm:$0xff]
    %v159 = vld [vmem:[#allocation2 + $0x8] sm:$0xff]
    %v160 = vld [vmem:[%s2] sm:$0x1]
    %v162 = vlaneseq
    %v163 = vshrl.u32 %v162, 7
    %v164 = vsub.s32 0, %v163
    %v165 = vrot.slane %v160, %v164
    %v167 = vadd.f32 %v158, %v165
    %v168 = vadd.f32 %v159, %v165
    %v169 = vmax.f32 %v167, 0.0
    %v170 = vmax.f32 %v168, 0.0
    %v171 = vpack.c.bf16 %v170, %v169
    %v172 = vld [vmem:[%s3] sm:$0xf]
    %v173 = vld [vmem:[%s3 + $0x4] sm:$0xf]
    %v174 = vld [vmem:[%s3 + $0x8] sm:$0xf]
    %v175 = vld [vmem:[%s3 + $0xc] sm:$0xf]
    %v176 = vld [vmem:[%s3 + $0x10] sm:$0xf]
    %v177 = vld [vmem:[%s3 + $0x14] sm:$0xf]
    %v178 = vld [vmem:[%s3 + $0x18] sm:$0xf]
    %v179 = vld [vmem:[%s3 + $0x1c] sm:$0xf]
    %v180 = vld [vmem:[%s3 + $0x20] sm:$0xf]
    %v181 = vld [vmem:[%s3 + $0x24] sm:$0xf]
    %v182 = vld [vmem:[%s3 + $0x28] sm:$0xf]
    %v183 = vld [vmem:[%s3 + $0x2c] sm:$0xf]
    %v184 = vld [vmem:[%s3 + $0x30] sm:$0xf]
    %v185 = vld [vmem:[%s3 + $0x34] sm:$0xf]
    %v186 = vld [vmem:[%s3 + $0x38] sm:$0xf]
    %v187 = vld [vmem:[%s3 + $0x3c] sm:$0xf]
    %v188 = vld [vmem:[%s4] sm:$0x1]
    %v190 = vlaneseq
    %v191 = vshrl.u32 %v190, 7
    %v192 = vsub.s32 0, %v191
    %v193 = vrot.slane %v188, %v192
    %v211 = vunpack.c.l.b16 %v172
    %v212 = vunpack.c.l.b16 %v173
    %v213 = vunpack.c.l.b16 %v174
    %v214 = vunpack.c.l.b16 %v175
    %v215 = vunpack.c.l.b16 %v176
    %v216 = vunpack.c.l.b16 %v177
    %v217 = vunpack.c.l.b16 %v178
    %v218 = vunpack.c.l.b16 %v179
    %v219 = vunpack.c.l.b16 %v180
    %v220 = vunpack.c.l.b16 %v181
    %v221 = vunpack.c.l.b16 %v182
    %v222 = vunpack.c.l.b16 %v183
    %v223 = vunpack.c.l.b16 %v184
    %v224 = vunpack.c.l.b16 %v185
    %v225 = vunpack.c.l.b16 %v186
    %v226 = vunpack.c.l.b16 %v187
    %v227 = vpack.c.b16 %v212, %v211
    %v228 = vpack.c.b16 %v214, %v213
    %v229 = vpack.c.b16 %v216, %v215
    %v230 = vpack.c.b16 %v218, %v217
    %v231 = vpack.c.b16 %v220, %v219
    %v232 = vpack.c.b16 %v222, %v221
    %v233 = vpack.c.b16 %v224, %v223
    %v234 = vpack.c.b16 %v226, %v225
    %243 = vmatprep.subr.bf16.mxu0 0
    %244 = vmatpush1.bf16.msra.mxu0 %v227
    %245 = vmatprep.subr.bf16.mxu0 0
    %246 = vmatpush1.bf16.msra.mxu0 %v228
    %247 = vmatprep.subr.bf16.mxu0 0
    %248 = vmatpush1.bf16.msra.mxu0 %v229
    %249 = vmatprep.subr.bf16.mxu0 0
    %250 = vmatpush1.bf16.msra.mxu0 %v230
    %251 = vmatprep.subr.bf16.mxu0 0
    %252 = vmatpush1.bf16.msra.mxu0 %v231
    %253 = vmatprep.subr.bf16.mxu0 0
    %254 = vmatpush1.bf16.msra.mxu0 %v232
    %255 = vmatprep.subr.bf16.mxu0 0
    %256 = vmatpush1.bf16.msra.mxu0 %v233
    %257 = vmatprep.subr.bf16.mxu0 0
    %258 = vmatpush1.bf16.msra.mxu0 %v234
    %259 = vmatprep.subr.bf16.mxu0 0
    %260 = vmatpush1.bf16.msra.mxu0 0
    %261 = vmatprep.subr.bf16.mxu0 0
    %262 = vmatpush1.bf16.msra.mxu0 0
    %263 = vmatprep.subr.bf16.mxu0 0
    %264 = vmatpush1.bf16.msra.mxu0 0
    %265 = vmatprep.subr.bf16.mxu0 0
    %266 = vmatpush1.bf16.msra.mxu0 0
    %267 = vmatprep.subr.bf16.mxu0 0
    %268 = vmatpush1.bf16.msra.mxu0 0
    %269 = vmatprep.subr.bf16.mxu0 0
    %270 = vmatpush1.bf16.msra.mxu0 0
    %271 = vmatprep.subr.bf16.mxu0 0
    %272 = vmatpush1.bf16.msra.mxu0 0
    %273 = vmatprep.subr.bf16.mxu0 0
    %274 = vmatpush1.bf16.msra.mxu0 0
    %275 = vmatprep.mubr.bf16.mxu0 0
    %276 = vmatmul.mubr.bf16.gmra.mrb[0].mxu0 %v171
    %v277 = vpop.f32.mrb[0].mxu0
    %v278 = vadd.f32 %v193, %v277
    %v279 = vpop.f32.mrb[0].mxu0
    %v280 = vpop.f32.mrb[0].mxu0
    %v281 = vadd.f32 %v193, %v280
    %v282 = vpop.f32.mrb[0].mxu0
    %283 = vdwg.mxu0
    %v284 = vmax.f32 %v278, 0.0
    %v285 = vmax.f32 %v281, 0.0
    %286 = vst [vmem:[%s9] sm:$0xff] %v284
    %287 = vst [vmem:[%s9 + $0x8] sm:$0xff] %v285
    %v288 = vld [vmem:[%s5] sm:$0xf]
    %v289 = vld [vmem:[%s5 + $0x4] sm:$0xf]
    %v290 = vld [vmem:[%s5 + $0x8] sm:$0xf]
    %v291 = vld [vmem:[%s5 + $0xc] sm:$0xf]
    %v292 = vld [vmem:[%s5 + $0x10] sm:$0xf]
    %v293 = vld [vmem:[%s5 + $0x14] sm:$0xf]
    %v294 = vld [vmem:[%s5 + $0x18] sm:$0xf]
    %v295 = vld [vmem:[%s5 + $0x1c] sm:$0xf]
    %v296 = vld [vmem:[%s5 + $0x20] sm:$0xf]
    %v297 = vld [vmem:[%s5 + $0x24] sm:$0xf]
    %v298 = vld [vmem:[%s5 + $0x28] sm:$0xf]
    %v299 = vld [vmem:[%s5 + $0x2c] sm:$0xf]
    %v300 = vld [vmem:[%s5 + $0x30] sm:$0xf]
    %v301 = vld [vmem:[%s5 + $0x34] sm:$0xf]
    %v302 = vld [vmem:[%s5 + $0x38] sm:$0xf]
    %v303 = vld [vmem:[%s5 + $0x3c] sm:$0xf]
    %v320 = vunpack.c.l.b16 %v288
    %v321 = vunpack.c.l.b16 %v289
    %v322 = vunpack.c.l.b16 %v290
    %v323 = vunpack.c.l.b16 %v291
    %v324 = vunpack.c.l.b16 %v292
    %v325 = vunpack.c.l.b16 %v293
    %v326 = vunpack.c.l.b16 %v294
    %v327 = vunpack.c.l.b16 %v295
    %v328 = vunpack.c.l.b16 %v296
    %v329 = vunpack.c.l.b16 %v297
    %v330 = vunpack.c.l.b16 %v298
    %v331 = vunpack.c.l.b16 %v299
    %v332 = vunpack.c.l.b16 %v300
    %v333 = vunpack.c.l.b16 %v301
    %v334 = vunpack.c.l.b16 %v302
    %v335 = vunpack.c.l.b16 %v303
    %v336 = vpack.c.b16 %v321, %v320
    %v337 = vpack.c.b16 %v323, %v322
    %v338 = vpack.c.b16 %v325, %v324
    %v339 = vpack.c.b16 %v327, %v326
    %v340 = vpack.c.b16 %v329, %v328
    %v341 = vpack.c.b16 %v331, %v330
    %v342 = vpack.c.b16 %v333, %v332
    %v343 = vpack.c.b16 %v335, %v334
    %352 = vmatprep.subr.bf16.mxu0 0
    %353 = vmatpush1.bf16.msra.mxu0 %v336
    %354 = vmatprep.subr.bf16.mxu0 0
    %355 = vmatpush1.bf16.msra.mxu0 %v337
    %356 = vmatprep.subr.bf16.mxu0 0
    %357 = vmatpush1.bf16.msra.mxu0 %v338
    %358 = vmatprep.subr.bf16.mxu0 0
    %359 = vmatpush1.bf16.msra.mxu0 %v339
    %360 = vmatprep.subr.bf16.mxu0 0
    %361 = vmatpush1.bf16.msra.mxu0 %v340
    %362 = vmatprep.subr.bf16.mxu0 0
    %363 = vmatpush1.bf16.msra.mxu0 %v341
    %364 = vmatprep.subr.bf16.mxu0 0
    %365 = vmatpush1.bf16.msra.mxu0 %v342
    %366 = vmatprep.subr.bf16.mxu0 0
    %367 = vmatpush1.bf16.msra.mxu0 %v343
    %368 = vmatprep.subr.bf16.mxu0 0
    %369 = vmatpush1.bf16.msra.mxu0 0
    %370 = vmatprep.subr.bf16.mxu0 0
    %371 = vmatpush1.bf16.msra.mxu0 0
    %372 = vmatprep.subr.bf16.mxu0 0
    %373 = vmatpush1.bf16.msra.mxu0 0
    %374 = vmatprep.subr.bf16.mxu0 0
    %375 = vmatpush1.bf16.msra.mxu0 0
    %376 = vmatprep.subr.bf16.mxu0 0
    %377 = vmatpush1.bf16.msra.mxu0 0
    %378 = vmatprep.subr.bf16.mxu0 0
    %379 = vmatpush1.bf16.msra.mxu0 0
    %380 = vmatprep.subr.bf16.mxu0 0
    %381 = vmatpush1.bf16.msra.mxu0 0
    %382 = vmatprep.subr.bf16.mxu0 0
    %383 = vmatpush1.bf16.msra.mxu0 0
    %384 = vmatprep.mubr.bf16.mxu0 0
    %385 = vmatmul.mubr.bf16.gmra.mrb[0].mxu0 %v171
    %v386 = vpop.f32.mrb[0].mxu0
    %v387 = vadd.f32 0.0, %v386
    %v388 = vpop.f32.mrb[0].mxu0
    %v389 = vpop.f32.mrb[0].mxu0
    %v390 = vadd.f32 0.0, %v389
    %v391 = vpop.f32.mrb[0].mxu0
    %392 = vdwg.mxu0
    %393 = vst [vmem:[%s7] sm:$0xff] %v387
    %394 = vst [vmem:[%s7 + $0x8] sm:$0xff] %v390
    %v395 = vld [vmem:[%s6] sm:$0xf]
    %v396 = vld [vmem:[%s6 + $0x4] sm:$0xf]
    %v397 = vld [vmem:[%s6 + $0x8] sm:$0xf]
    %v398 = vld [vmem:[%s6 + $0xc] sm:$0xf]
    %v399 = vld [vmem:[%s6 + $0x10] sm:$0xf]
    %v400 = vld [vmem:[%s6 + $0x14] sm:$0xf]
    %v401 = vld [vmem:[%s6 + $0x18] sm:$0xf]
    %v402 = vld [vmem:[%s6 + $0x1c] sm:$0xf]
    %v403 = vld [vmem:[%s6 + $0x20] sm:$0xf]
    %v404 = vld [vmem:[%s6 + $0x24] sm:$0xf]
    %v405 = vld [vmem:[%s6 + $0x28] sm:$0xf]
    %v406 = vld [vmem:[%s6 + $0x2c] sm:$0xf]
    %v407 = vld [vmem:[%s6 + $0x30] sm:$0xf]
    %v408 = vld [vmem:[%s6 + $0x34] sm:$0xf]
    %v409 = vld [vmem:[%s6 + $0x38] sm:$0xf]
    %v410 = vld [vmem:[%s6 + $0x3c] sm:$0xf]
    %v427 = vunpack.c.l.b16 %v395
    %v428 = vunpack.c.l.b16 %v396
    %v429 = vunpack.c.l.b16 %v397
    %v430 = vunpack.c.l.b16 %v398
    %v431 = vunpack.c.l.b16 %v399
    %v432 = vunpack.c.l.b16 %v400
    %v433 = vunpack.c.l.b16 %v401
    %v434 = vunpack.c.l.b16 %v402
    %v435 = vunpack.c.l.b16 %v403
    %v436 = vunpack.c.l.b16 %v404
    %v437 = vunpack.c.l.b16 %v405
    %v438 = vunpack.c.l.b16 %v406
    %v439 = vunpack.c.l.b16 %v407
    %v440 = vunpack.c.l.b16 %v408
    %v441 = vunpack.c.l.b16 %v409
    %v442 = vunpack.c.l.b16 %v410
    %v443 = vpack.c.b16 %v428, %v427
    %v444 = vpack.c.b16 %v430, %v429
    %v445 = vpack.c.b16 %v432, %v431
    %v446 = vpack.c.b16 %v434, %v433
    %v447 = vpack.c.b16 %v436, %v435
    %v448 = vpack.c.b16 %v438, %v437
    %v449 = vpack.c.b16 %v440, %v439
    %v450 = vpack.c.b16 %v442, %v441
    %459 = vmatprep.subr.bf16.mxu0 0
    %460 = vmatpush1.bf16.msra.mxu0 %v443
    %461 = vmatprep.subr.bf16.mxu0 0
    %462 = vmatpush1.bf16.msra.mxu0 %v444
    %463 = vmatprep.subr.bf16.mxu0 0
    %464 = vmatpush1.bf16.msra.mxu0 %v445
    %465 = vmatprep.subr.bf16.mxu0 0
    %466 = vmatpush1.bf16.msra.mxu0 %v446
    %467 = vmatprep.subr.bf16.mxu0 0
    %468 = vmatpush1.bf16.msra.mxu0 %v447
    %469 = vmatprep.subr.bf16.mxu0 0
    %470 = vmatpush1.bf16.msra.mxu0 %v448
    %471 = vmatprep.subr.bf16.mxu0 0
    %472 = vmatpush1.bf16.msra.mxu0 %v449
    %473 = vmatprep.subr.bf16.mxu0 0
    %474 = vmatpush1.bf16.msra.mxu0 %v450
    %475 = vmatprep.subr.bf16.mxu0 0
    %476 = vmatpush1.bf16.msra.mxu0 0
    %477 = vmatprep.subr.bf16.mxu0 0
    %478 = vmatpush1.bf16.msra.mxu0 0
    %479 = vmatprep.subr.bf16.mxu0 0
    %480 = vmatpush1.bf16.msra.mxu0 0
    %481 = vmatprep.subr.bf16.mxu0 0
    %482 = vmatpush1.bf16.msra.mxu0 0
    %483 = vmatprep.subr.bf16.mxu0 0
    %484 = vmatpush1.bf16.msra.mxu0 0
    %485 = vmatprep.subr.bf16.mxu0 0
    %486 = vmatpush1.bf16.msra.mxu0 0
    %487 = vmatprep.subr.bf16.mxu0 0
    %488 = vmatpush1.bf16.msra.mxu0 0
    %489 = vmatprep.subr.bf16.mxu0 0
    %490 = vmatpush1.bf16.msra.mxu0 0
    %491 = vmatprep.mubr.bf16.mxu0 0
    %492 = vmatmul.mubr.bf16.gmra.mrb[0].mxu0 %v171
    %v493 = vpop.f32.mrb[0].mxu0
    %v494 = vadd.f32 0.0, %v493
    %v495 = vpop.f32.mrb[0].mxu0
    %v496 = vpop.f32.mrb[0].mxu0
    %v497 = vadd.f32 0.0, %v496
    %v498 = vpop.f32.mrb[0].mxu0
    %499 = vdwg.mxu0
    %500 = vst [vmem:[%s8] sm:$0xff] %v494
    %501 = vst [vmem:[%s8 + $0x8] sm:$0xff] %v497
  $region37: #{_forward_core.2} parent=0 // pred_fallthru
    _
  // Predicated region
  $region38: #{_forward_core.2} parent=0 // pred_check
    _
  $region39: #{_forward_core.2} parent=0 // pred_check_branch
    %503 = sbr.rel (0) target = $region41
  $region40: #{_forward_core.2} parent=0 // pred_region
    _
  $region41: #{_forward_core.2} parent=0 // pred_fallthru
    _
  // Predicated region
  $region42: #{_forward_core.2} parent=0 // pred_check
    _
  $region43: #{_forward_core.2} parent=0 // pred_check_branch
    %505 = sbr.rel (0) target = $region45
  $region44: #{_forward_core.2} parent=0 // pred_region
    _
  $region45: #{_forward_core.2} parent=0 // pred_fallthru
    _
  // Predicated region
  $region46: #{_forward_core.2} parent=0 // pred_check
    _
  $region47: #{_forward_core.2} parent=0 // pred_check_branch
    %507 = sbr.rel (0) target = $region49
  $region48: #{_forward_core.2} parent=0 // pred_region
    _
  $region49: #{_forward_core.2} parent=0 // pred_fallthru
    _
  // Predicated region
  $region50: #{_forward_core.2} parent=0 // pred_check
    _
  $region51: #{_forward_core.2} parent=0 // pred_check_branch
    %509 = sbr.rel (0) target = $region53
  $region52: #{_forward_core.2} parent=0 // pred_region
    _
  $region53: #{_forward_core.2} parent=0 // pred_fallthru
    _
  // Predicated region
  $region54: #{_forward_core.2} parent=0 // pred_check
    _
  $region55: #{_forward_core.2} parent=0 // pred_check_branch
    %511 = sbr.rel (0) target = $region57
  $region56: #{_forward_core.2} parent=0 // pred_region
    _
  $region57: #{_forward_core.2} parent=0 // pred_fallthru
    _
  // Predicated region
  $region58: #{_forward_core.2} parent=0 // pred_check
    _
  $region59: #{_forward_core.2} parent=0 // pred_check_branch
    %513 = sbr.rel (0) target = $region61
  $region60: #{_forward_core.2} parent=0 // pred_region
    _
  $region61: #{_forward_core.2} parent=0 // pred_fallthru
    _

// kernel: _forward_core.3
$region0: #{_forward_core.3}
  #allocation0 [shape = 'u32[]', space=smem, size = 0x4, offset = 0x4, fixed_abs, tag = 'smem constant byte address 0x4 - core index']
  #allocation1 [shape = 'u32[144,128]{1,0:T(1,128)}', space=vmem, size = 0x12000, scoped, tag = 'internal scratch']
  #allocation2 [shape = 's32[1]{0}', space=sflag, size = 0x4, scoped, tag = 'scoped memory for _forward_core.3']
  #allocation3 [shape = 'u8[512]{0}', space=smem, size = 0x200, scoped, tag = 'prefetched SMEM operand 0']
  %s0 = inlined_call_operand.vmem [shape: s32[2], index: 0, kind: input, shape index: {}]
  %s1 = inlined_call_operand.vmem [shape: f32[2,8,128], index: 1, kind: input, shape index: {}]
  %s2 = inlined_call_operand.vmem [shape: f32[2,8,128], index: 2, kind: input, shape index: {}]
  %s3 = inlined_call_operand.vmem [shape: f32[2,8,128], index: 3, kind: input, shape index: {}]
  %s4 = inlined_call_operand.vmem [shape: s32[2,16,1], index: 4, kind: input, shape index: {}]
  %s5 = inlined_call_operand.vmem [shape: s32[2,16,1], index: 5, kind: input, shape index: {}]
  %s6 = inlined_call_operand.vmem [shape: s32[2,8,1], index: 6, kind: input, shape index: {}]
  %s7 = inlined_call_operand.vmem [shape: s32[2,16,1], index: 7, kind: input, shape index: {}]
  %s8 = inlined_call_operand.vmem [shape: f32[1,128], index: 8, kind: input, shape index: {}]
  %s9 = inlined_call_operand.vmem [shape: f32[128,128], index: 9, kind: input, shape index: {}]
  %s10 = inlined_call_operand.vmem [shape: f32[1,128], index: 10, kind: input, shape index: {}]
  %s11 = inlined_call_operand.vmem [shape: f32[1,128], index: 11, kind: input, shape index: {}]
  %s12 = inlined_call_operand.vmem [shape: f32[1,128], index: 12, kind: input, shape index: {}]
  %s13 = inlined_call_operand.vmem [shape: f32[128,128], index: 13, kind: input, shape index: {}]
  %s14 = inlined_call_operand.vmem [shape: f32[1,128], index: 14, kind: input, shape index: {}]
  %s15 = inlined_call_operand.vmem [shape: f32[128,128], index: 15, kind: input, shape index: {}]
  %s16 = inlined_call_operand.vmem [shape: f32[1,128], index: 16, kind: input, shape index: {}]
  %s17 = inlined_call_operand.hbm [shape: f32[2,8,128], index: 17, kind: output, shape index: {0}]
  %s18 = inlined_call_operand.hbm [shape: f32[2,16,128], index: 18, kind: output, shape index: {1}]
  %19 = xla_tuple %s17, %s18
  %s20 = sld [smem:[#allocation0]]
  $region105: #{_forward_core.3} parent=0
    _
  %s22 = ssub.s32 1, %s20
  %s23 = scalar_select 0, %s22, %s20
  %s24 = sshll.u32 %s0, 4
  %s25 = int_to_ptr.vmem [resolvable:$true] %s24
  %27 = dma.vmem_to_smem %s25, 16, [#allocation3], [#allocation2]
  %28 = dma.done [#allocation2], 16
  %29 = sfence
  $region1: #{_forward_core.3} parent=0
    #allocation4 [shape = 'u8[8192]{0}', space=vmem, size = 0x2000, scoped, tag = 'output window, operand 0']
    #allocation5 [shape = 's32[2]{0}', space=sflag, size = 0x8, scoped, tag = 'scoped memory for _forward_core.3']
    #allocation6 [shape = 'u8[16384]{0}', space=vmem, size = 0x4000, scoped, tag = 'output window, operand 1']
    #allocation7 [shape = 's32[2]{0}', space=sflag, size = 0x8, scoped, tag = 'scoped memory for _forward_core.3']
    %30 = vsyncpa [#allocation5], 0
    %s31 = scalar_lea.sflag [#allocation5], 1
    %32 = vsyncpa %s31, 0
    %33 = vsyncpa [#allocation7], 0
    %s34 = scalar_lea.sflag [#allocation7], 1
    %35 = vsyncpa %s34, 0
    loop: start=0, step=1, limit=4
    $region2: #{_forward_core.3} parent=1 // loop_pre_header
      _
    $region3: #{_forward_core.3} parent=1 // loop_header
      %s37 = sphi 0, %s41
      %p38 = scmp.ge.s32.totalorder %s37, 4
      %s47 = sphi 0, %s49
      %s50 = sphi 0, %s47
      %s51 = sphi 0, %s50
      %s67 = sphi 0, %s51
      %s73 = sphi 0, %s75
      %s76 = sphi 0, %s73
      %s77 = sphi 0, %s76
      %s93 = sphi 0, %s77
      %s99 = sphi 0, %s101
      %s102 = sphi 0, %s99
      %s103 = sphi 0, %s102
      %s119 = sphi 0, %s103
      %s125 = sphi 0, %s127
      %s128 = sphi 0, %s125
      %s129 = sphi 0, %s128
      %s145 = sphi 0, %s129
      %s151 = sphi 0, %s153
      %s154 = sphi 0, %s151
      %s155 = sphi 0, %s154
      %s171 = sphi 0, %s155
      %s177 = sphi 0, %s179
      %s180 = sphi 0, %s177
      %s181 = sphi 0, %s180
      %s197 = sphi 0, %s181
      %s203 = sphi 0, %s205
      %s206 = sphi 0, %s203
      %s207 = sphi 0, %s206
      %s223 = sphi 0, %s207
      %s227 = sphi 0, %s227
      %s229 = sphi 0, %s227
      %s230 = sphi 0, %s229
      %s244 = sphi 0, %s230
      %s248 = sphi 0, %s248
      %s250 = sphi 0, %s248
      %s251 = sphi 0, %s250
      %s265 = sphi 0, %s251
      %s269 = sphi 0, %s269
      %s271 = sphi 0, %s269
      %s272 = sphi 0, %s271
      %s286 = sphi 0, %s272
      %s290 = sphi 0, %s290
      %s292 = sphi 0, %s290
      %s293 = sphi 0, %s292
      %s307 = sphi 0, %s293
      %s311 = sphi 0, %s311
      %s313 = sphi 0, %s311
      %s314 = sphi 0, %s313
      %s328 = sphi 0, %s314
      %s332 = sphi 0, %s332
      %s334 = sphi 0, %s332
      %s335 = sphi 0, %s334
      %s349 = sphi 0, %s335
      %s353 = sphi 0, %s353
      %s355 = sphi 0, %s353
      %s356 = sphi 0, %s355
      %s370 = sphi 0, %s356
      %s374 = sphi 0, %s374
      %s376 = sphi 0, %s374
      %s377 = sphi 0, %s376
      %s391 = sphi 0, %s377
      %s395 = sphi 0, %s395
      %s397 = sphi 0, %s395
      %s398 = sphi 0, %s397
      %s412 = sphi 0, %s398
      %s418 = sphi 0, %s420
      %s421 = sphi 0, %s418
      %s422 = sphi 0, %s421
      %s438 = sphi 0, %s422
      %s444 = sphi 0, %s446
      %s447 = sphi 0, %s444
      %s448 = sphi 0, %s447
      %s464 = sphi 0, %s448
    $region4: #{_forward_core.3} parent=1 // loop_header_branch
      %40 = sbr.rel (%p38) target = $region8
    $region5: #{_forward_core.3} parent=1 // loop_body
      %s42 = ssub.s32 %s37, 1
      %s43 = ssub.s32 %s37, 2
      %s44 = sadd.s32 %s37, 1
      %s45 = ssub.s32 %s37, %s44
      %p46 = scmp.eq.s32.totalorder %s45, 0
      %s48 = sadd.s32 %s47, 1
      %s49 = scalar_select %p46, %s47, %s48
      %p52 = pneg %p46
      %p53 = scmp.eq.s32.totalorder %s37, 1
      %p54 = por %p52, %p53
      %p55 = scmp.ne.s32.totalorder %s47, %s50
      %p56 = scmp.eq.s32.totalorder %s37, 0
      %p57 = por %p55, %p56
      %p58 = scmp.ne.s32.totalorder %s47, %s50
      %p59 = scmp.eq.s32.totalorder %s42, 1
      %p60 = por %p58, %p59
      %p61 = scmp.ne.s32.totalorder %s50, %s51
      %p62 = scmp.eq.s32.totalorder %s42, 0
      %p63 = por %p61, %p62
      %p64 = scmp.ne.s32.totalorder %s50, %s51
      %p65 = scmp.eq.s32.totalorder %s43, 1
      %p66 = por %p64, %p65
      %p68 = scmp.ne.s32.totalorder %s51, %s67
      %p69 = scmp.eq.s32.totalorder %s43, 0
      %p70 = por %p68, %p69
      %s71 = ssub.s32 %s37, %s44
      %p72 = scmp.eq.s32.totalorder %s71, 0
      %s74 = sadd.s32 %s73, 1
      %s75 = scalar_select %p72, %s73, %s74
      %p78 = pneg %p72
      %p79 = scmp.eq.s32.totalorder %s37, 1
      %p80 = por %p78, %p79
      %p81 = scmp.ne.s32.totalorder %s73, %s76
      %p82 = scmp.eq.s32.totalorder %s37, 0
      %p83 = por %p81, %p82
      %p84 = scmp.ne.s32.totalorder %s73, %s76
      %p85 = scmp.eq.s32.totalorder %s42, 1
      %p86 = por %p84, %p85
      %p87 = scmp.ne.s32.totalorder %s76, %s77
      %p88 = scmp.eq.s32.totalorder %s42, 0
      %p89 = por %p87, %p88
      %p90 = scmp.ne.s32.totalorder %s76, %s77
      %p91 = scmp.eq.s32.totalorder %s43, 1
      %p92 = por %p90, %p91
      %p94 = scmp.ne.s32.totalorder %s77, %s93
      %p95 = scmp.eq.s32.totalorder %s43, 0
      %p96 = por %p94, %p95
      %s97 = ssub.s32 %s37, %s44
      %p98 = scmp.eq.s32.totalorder %s97, 0
      %s100 = sadd.s32 %s99, 1
      %s101 = scalar_select %p98, %s99, %s100
      %p104 = pneg %p98
      %p105 = scmp.eq.s32.totalorder %s37, 1
      %p106 = por %p104, %p105
      %p107 = scmp.ne.s32.totalorder %s99, %s102
      %p108 = scmp.eq.s32.totalorder %s37, 0
      %p109 = por %p107, %p108
      %p110 = scmp.ne.s32.totalorder %s99, %s102
      %p111 = scmp.eq.s32.totalorder %s42, 1
      %p112 = por %p110, %p111
      %p113 = scmp.ne.s32.totalorder %s102, %s103
      %p114 = scmp.eq.s32.totalorder %s42, 0
      %p115 = por %p113, %p114
      %p116 = scmp.ne.s32.totalorder %s102, %s103
      %p117 = scmp.eq.s32.totalorder %s43, 1
      %p118 = por %p116, %p117
      %p120 = scmp.ne.s32.totalorder %s103, %s119
      %p121 = scmp.eq.s32.totalorder %s43, 0
      %p122 = por %p120, %p121
      %s123 = ssub.s32 %s37, %s44
      %p124 = scmp.eq.s32.totalorder %s123, 0
      %s126 = sadd.s32 %s125, 1
      %s127 = scalar_select %p124, %s125, %s126
      %p130 = pneg %p124
      %p131 = scmp.eq.s32.totalorder %s37, 1
      %p132 = por %p130, %p131
      %p133 = scmp.ne.s32.totalorder %s125, %s128
      %p134 = scmp.eq.s32.totalorder %s37, 0
      %p135 = por %p133, %p134
      %p136 = scmp.ne.s32.totalorder %s125, %s128
      %p137 = scmp.eq.s32.totalorder %s42, 1
      %p138 = por %p136, %p137
      %p139 = scmp.ne.s32.totalorder %s128, %s129
      %p140 = scmp.eq.s32.totalorder %s42, 0
      %p141 = por %p139, %p140
      %p142 = scmp.ne.s32.totalorder %s128, %s129
      %p143 = scmp.eq.s32.totalorder %s43, 1
      %p144 = por %p142, %p143
      %p146 = scmp.ne.s32.totalorder %s129, %s145
      %p147 = scmp.eq.s32.totalorder %s43, 0
      %p148 = por %p146, %p147
      %s149 = ssub.s32 %s37, %s44
      %p150 = scmp.eq.s32.totalorder %s149, 0
      %s152 = sadd.s32 %s151, 1
      %s153 = scalar_select %p150, %s151, %s152
      %p156 = pneg %p150
      %p157 = scmp.eq.s32.totalorder %s37, 1
      %p158 = por %p156, %p157
      %p159 = scmp.ne.s32.totalorder %s151, %s154
      %p160 = scmp.eq.s32.totalorder %s37, 0
      %p161 = por %p159, %p160
      %p162 = scmp.ne.s32.totalorder %s151, %s154
      %p163 = scmp.eq.s32.totalorder %s42, 1
      %p164 = por %p162, %p163
      %p165 = scmp.ne.s32.totalorder %s154, %s155
      %p166 = scmp.eq.s32.totalorder %s42, 0
      %p167 = por %p165, %p166
      %p168 = scmp.ne.s32.totalorder %s154, %s155
      %p169 = scmp.eq.s32.totalorder %s43, 1
      %p170 = por %p168, %p169
      %p172 = scmp.ne.s32.totalorder %s155, %s171
      %p173 = scmp.eq.s32.totalorder %s43, 0
      %p174 = por %p172, %p173
      %s175 = ssub.s32 %s37, %s44
      %p176 = scmp.eq.s32.totalorder %s175, 0
      %s178 = sadd.s32 %s177, 1
      %s179 = scalar_select %p176, %s177, %s178
      %p182 = pneg %p176
      %p183 = scmp.eq.s32.totalorder %s37, 1
      %p184 = por %p182, %p183
      %p185 = scmp.ne.s32.totalorder %s177, %s180
      %p186 = scmp.eq.s32.totalorder %s37, 0
      %p187 = por %p185, %p186
      %p188 = scmp.ne.s32.totalorder %s177, %s180
      %p189 = scmp.eq.s32.totalorder %s42, 1
      %p190 = por %p188, %p189
      %p191 = scmp.ne.s32.totalorder %s180, %s181
      %p192 = scmp.eq.s32.totalorder %s42, 0
      %p193 = por %p191, %p192
      %p194 = scmp.ne.s32.totalorder %s180, %s181
      %p195 = scmp.eq.s32.totalorder %s43, 1
      %p196 = por %p194, %p195
      %p198 = scmp.ne.s32.totalorder %s181, %s197
      %p199 = scmp.eq.s32.totalorder %s43, 0
      %p200 = por %p198, %p199
      %s201 = ssub.s32 %s37, %s44
      %p202 = scmp.eq.s32.totalorder %s201, 0
      %s204 = sadd.s32 %s203, 1
      %s205 = scalar_select %p202, %s203, %s204
      %p208 = pneg %p202
      %p209 = scmp.eq.s32.totalorder %s37, 1
      %p210 = por %p208, %p209
      %p211 = scmp.ne.s32.totalorder %s203, %s206
      %p212 = scmp.eq.s32.totalorder %s37, 0
      %p213 = por %p211, %p212
      %p214 = scmp.ne.s32.totalorder %s203, %s206
      %p215 = scmp.eq.s32.totalorder %s42, 1
      %p216 = por %p214, %p215
      %p217 = scmp.ne.s32.totalorder %s206, %s207
      %p218 = scmp.eq.s32.totalorder %s42, 0
      %p219 = por %p217, %p218
      %p220 = scmp.ne.s32.totalorder %s206, %s207
      %p221 = scmp.eq.s32.totalorder %s43, 1
      %p222 = por %p220, %p221
      %p224 = scmp.ne.s32.totalorder %s207, %s223
      %p225 = scmp.eq.s32.totalorder %s43, 0
      %p226 = por %p224, %p225
      %s228 = sadd.s32 %s227, 1
      %p231 = scmp.eq.s32.totalorder %s37, 1
      %p232 = scmp.ne.s32.totalorder %s227, %s229
      %p233 = scmp.eq.s32.totalorder %s37, 0
      %p234 = por %p232, %p233
      %p235 = scmp.ne.s32.totalorder %s227, %s229
      %p236 = scmp.eq.s32.totalorder %s42, 1
      %p237 = por %p235, %p236
      %p238 = scmp.ne.s32.totalorder %s229, %s230
      %p239 = scmp.eq.s32.totalorder %s42, 0
      %p240 = por %p238, %p239
      %p241 = scmp.ne.s32.totalorder %s229, %s230
      %p242 = scmp.eq.s32.totalorder %s43, 1
      %p243 = por %p241, %p242
      %p245 = scmp.ne.s32.totalorder %s230, %s244
      %p246 = scmp.eq.s32.totalorder %s43, 0
      %p247 = por %p245, %p246
      %s249 = sadd.s32 %s248, 1
      %p252 = scmp.eq.s32.totalorder %s37, 1
      %p253 = scmp.ne.s32.totalorder %s248, %s250
      %p254 = scmp.eq.s32.totalorder %s37, 0
      %p255 = por %p253, %p254
      %p256 = scmp.ne.s32.totalorder %s248, %s250
      %p257 = scmp.eq.s32.totalorder %s42, 1
      %p258 = por %p256, %p257
      %p259 = scmp.ne.s32.totalorder %s250, %s251
      %p260 = scmp.eq.s32.totalorder %s42, 0
      %p261 = por %p259, %p260
      %p262 = scmp.ne.s32.totalorder %s250, %s251
      %p263 = scmp.eq.s32.totalorder %s43, 1
      %p264 = por %p262, %p263
      %p266 = scmp.ne.s32.totalorder %s251, %s265
      %p267 = scmp.eq.s32.totalorder %s43, 0
      %p268 = por %p266, %p267
      %s270 = sadd.s32 %s269, 1
      %p273 = scmp.eq.s32.totalorder %s37, 1
      %p274 = scmp.ne.s32.totalorder %s269, %s271
      %p275 = scmp.eq.s32.totalorder %s37, 0
      %p276 = por %p274, %p275
      %p277 = scmp.ne.s32.totalorder %s269, %s271
      %p278 = scmp.eq.s32.totalorder %s42, 1
      %p279 = por %p277, %p278
      %p280 = scmp.ne.s32.totalorder %s271, %s272
      %p281 = scmp.eq.s32.totalorder %s42, 0
      %p282 = por %p280, %p281
      %p283 = scmp.ne.s32.totalorder %s271, %s272
      %p284 = scmp.eq.s32.totalorder %s43, 1
      %p285 = por %p283, %p284
      %p287 = scmp.ne.s32.totalorder %s272, %s286
      %p288 = scmp.eq.s32.totalorder %s43, 0
      %p289 = por %p287, %p288
      %s291 = sadd.s32 %s290, 1
      %p294 = scmp.eq.s32.totalorder %s37, 1
      %p295 = scmp.ne.s32.totalorder %s290, %s292
      %p296 = scmp.eq.s32.totalorder %s37, 0
      %p297 = por %p295, %p296
      %p298 = scmp.ne.s32.totalorder %s290, %s292
      %p299 = scmp.eq.s32.totalorder %s42, 1
      %p300 = por %p298, %p299
      %p301 = scmp.ne.s32.totalorder %s292, %s293
      %p302 = scmp.eq.s32.totalorder %s42, 0
      %p303 = por %p301, %p302
      %p304 = scmp.ne.s32.totalorder %s292, %s293
      %p305 = scmp.eq.s32.totalorder %s43, 1
      %p306 = por %p304, %p305
      %p308 = scmp.ne.s32.totalorder %s293, %s307
      %p309 = scmp.eq.s32.totalorder %s43, 0
      %p310 = por %p308, %p309
      %s312 = sadd.s32 %s311, 1
      %p315 = scmp.eq.s32.totalorder %s37, 1
      %p316 = scmp.ne.s32.totalorder %s311, %s313
      %p317 = scmp.eq.s32.totalorder %s37, 0
      %p318 = por %p316, %p317
      %p319 = scmp.ne.s32.totalorder %s311, %s313
      %p320 = scmp.eq.s32.totalorder %s42, 1
      %p321 = por %p319, %p320
      %p322 = scmp.ne.s32.totalorder %s313, %s314
      %p323 = scmp.eq.s32.totalorder %s42, 0
      %p324 = por %p322, %p323
      %p325 = scmp.ne.s32.totalorder %s313, %s314
      %p326 = scmp.eq.s32.totalorder %s43, 1
      %p327 = por %p325, %p326
      %p329 = scmp.ne.s32.totalorder %s314, %s328
      %p330 = scmp.eq.s32.totalorder %s43, 0
      %p331 = por %p329, %p330
      %s333 = sadd.s32 %s332, 1
      %p336 = scmp.eq.s32.totalorder %s37, 1
      %p337 = scmp.ne.s32.totalorder %s332, %s334
      %p338 = scmp.eq.s32.totalorder %s37, 0
      %p339 = por %p337, %p338
      %p340 = scmp.ne.s32.totalorder %s332, %s334
      %p341 = scmp.eq.s32.totalorder %s42, 1
      %p342 = por %p340, %p341
      %p343 = scmp.ne.s32.totalorder %s334, %s335
      %p344 = scmp.eq.s32.totalorder %s42, 0
      %p345 = por %p343, %p344
      %p346 = scmp.ne.s32.totalorder %s334, %s335
      %p347 = scmp.eq.s32.totalorder %s43, 1
      %p348 = por %p346, %p347
      %p350 = scmp.ne.s32.totalorder %s335, %s349
      %p351 = scmp.eq.s32.totalorder %s43, 0
      %p352 = por %p350, %p351
      %s354 = sadd.s32 %s353, 1
      %p357 = scmp.eq.s32.totalorder %s37, 1
      %p358 = scmp.ne.s32.totalorder %s353, %s355
      %p359 = scmp.eq.s32.totalorder %s37, 0
      %p360 = por %p358, %p359
      %p361 = scmp.ne.s32.totalorder %s353, %s355
      %p362 = scmp.eq.s32.totalorder %s42, 1
      %p363 = por %p361, %p362
      %p364 = scmp.ne.s32.totalorder %s355, %s356
      %p365 = scmp.eq.s32.totalorder %s42, 0
      %p366 = por %p364, %p365
      %p367 = scmp.ne.s32.totalorder %s355, %s356
      %p368 = scmp.eq.s32.totalorder %s43, 1
      %p369 = por %p367, %p368
      %p371 = scmp.ne.s32.totalorder %s356, %s370
      %p372 = scmp.eq.s32.totalorder %s43, 0
      %p373 = por %p371, %p372
      %s375 = sadd.s32 %s374, 1
      %p378 = scmp.eq.s32.totalorder %s37, 1
      %p379 = scmp.ne.s32.totalorder %s374, %s376
      %p380 = scmp.eq.s32.totalorder %s37, 0
      %p381 = por %p379, %p380
      %p382 = scmp.ne.s32.totalorder %s374, %s376
      %p383 = scmp.eq.s32.totalorder %s42, 1
      %p384 = por %p382, %p383
      %p385 = scmp.ne.s32.totalorder %s376, %s377
      %p386 = scmp.eq.s32.totalorder %s42, 0
      %p387 = por %p385, %p386
      %p388 = scmp.ne.s32.totalorder %s376, %s377
      %p389 = scmp.eq.s32.totalorder %s43, 1
      %p390 = por %p388, %p389
      %p392 = scmp.ne.s32.totalorder %s377, %s391
      %p393 = scmp.eq.s32.totalorder %s43, 0
      %p394 = por %p392, %p393
      %s396 = sadd.s32 %s395, 1
      %p399 = scmp.eq.s32.totalorder %s37, 1
      %p400 = scmp.ne.s32.totalorder %s395, %s397
      %p401 = scmp.eq.s32.totalorder %s37, 0
      %p402 = por %p400, %p401
      %p403 = scmp.ne.s32.totalorder %s395, %s397
      %p404 = scmp.eq.s32.totalorder %s42, 1
      %p405 = por %p403, %p404
      %p406 = scmp.ne.s32.totalorder %s397, %s398
      %p407 = scmp.eq.s32.totalorder %s42, 0
      %p408 = por %p406, %p407
      %p409 = scmp.ne.s32.totalorder %s397, %s398
      %p410 = scmp.eq.s32.totalorder %s43, 1
      %p411 = por %p409, %p410
      %p413 = scmp.ne.s32.totalorder %s398, %s412
      %p414 = scmp.eq.s32.totalorder %s43, 0
      %p415 = por %p413, %p414
      %s416 = ssub.s32 %s37, %s44
      %p417 = scmp.eq.s32.totalorder %s416, 0
      %s419 = sadd.s32 %s418, 1
      %s420 = scalar_select %p417, %s418, %s419
      %p423 = pneg %p417
      %p424 = scmp.eq.s32.totalorder %s37, 1
      %p425 = por %p423, %p424
      %p426 = scmp.ne.s32.totalorder %s418, %s421
      %p427 = scmp.eq.s32.totalorder %s37, 0
      %p428 = por %p426, %p427
      %p429 = scmp.ne.s32.totalorder %s418, %s421
      %p430 = scmp.eq.s32.totalorder %s42, 1
      %p431 = por %p429, %p430
      %p432 = scmp.ne.s32.totalorder %s421, %s422
      %p433 = scmp.eq.s32.totalorder %s42, 0
      %p434 = por %p432, %p433
      %p435 = scmp.ne.s32.totalorder %s421, %s422
      %p436 = scmp.eq.s32.totalorder %s43, 1
      %p437 = por %p435, %p436
      %p439 = scmp.ne.s32.totalorder %s422, %s438
      %p440 = scmp.eq.s32.totalorder %s43, 0
      %p441 = por %p439, %p440
      %s442 = ssub.s32 %s37, %s44
      %p443 = scmp.eq.s32.totalorder %s442, 0
      %s445 = sadd.s32 %s444, 1
      %s446 = scalar_select %p443, %s444, %s445
      %p449 = pneg %p443
      %p450 = scmp.eq.s32.totalorder %s37, 1
      %p451 = por %p449, %p450
      %p452 = scmp.ne.s32.totalorder %s444, %s447
      %p453 = scmp.eq.s32.totalorder %s37, 0
      %p454 = por %p452, %p453
      %p455 = scmp.ne.s32.totalorder %s444, %s447
      %p456 = scmp.eq.s32.totalorder %s42, 1
      %p457 = por %p455, %p456
      %p458 = scmp.ne.s32.totalorder %s447, %s448
      %p459 = scmp.eq.s32.totalorder %s42, 0
      %p460 = por %p458, %p459
      %p461 = scmp.ne.s32.totalorder %s447, %s448
      %p462 = scmp.eq.s32.totalorder %s43, 1
      %p463 = por %p461, %p462
      %p465 = scmp.ne.s32.totalorder %s448, %s464
      %p466 = scmp.eq.s32.totalorder %s43, 0
      %p467 = por %p465, %p466
      %p468 = scmp.le.s32.totalorder 1, %s37
      %p469 = scmp.lt.s32.totalorder %s37, 3
      %p470 = pnand %p468, %p469
      %p471 = pneg %p470
      // Predicated region
      $region9: #{_forward_core.3} parent=5 // pred_check
        _
      $region10: #{_forward_core.3} parent=5 // pred_check_branch
        %473 = sbr.rel (%p470) target = $region12
      $region11: #{_forward_core.3} parent=5 // pred_region
        %s474 = ssub.s32 %s37, 1
        // Predicated region
        $region13: #{_forward_core.3} parent=11 // pred_check
          %p475 = pneg %p240
        $region14: #{_forward_core.3} parent=11 // pred_check_branch
          %477 = sbr.rel (%p475) target = $region16
        $region15: #{_forward_core.3} parent=11 // pred_region
          _
        $region16: #{_forward_core.3} parent=11 // pred_fallthru
          _
        // Predicated region
        $region17: #{_forward_core.3} parent=11 // pred_check
          %p478 = pneg %p261
        $region18: #{_forward_core.3} parent=11 // pred_check_branch
          %480 = sbr.rel (%p478) target = $region20
        $region19: #{_forward_core.3} parent=11 // pred_region
          _
        $region20: #{_forward_core.3} parent=11 // pred_fallthru
          _
        // Predicated region
        $region21: #{_forward_core.3} parent=11 // pred_check
          %p481 = pneg %p282
        $region22: #{_forward_core.3} parent=11 // pred_check_branch
          %483 = sbr.rel (%p481) target = $region24
        $region23: #{_forward_core.3} parent=11 // pred_region
          _
        $region24: #{_forward_core.3} parent=11 // pred_fallthru
          _
        // Predicated region
        $region25: #{_forward_core.3} parent=11 // pred_check
          %p484 = pneg %p303
        $region26: #{_forward_core.3} parent=11 // pred_check_branch
          %486 = sbr.rel (%p484) target = $region28
        $region27: #{_forward_core.3} parent=11 // pred_region
          _
        $region28: #{_forward_core.3} parent=11 // pred_fallthru
          _
        // Predicated region
        $region29: #{_forward_core.3} parent=11 // pred_check
          %p487 = pneg %p324
        $region30: #{_forward_core.3} parent=11 // pred_check_branch
          %489 = sbr.rel (%p487) target = $region32
        $region31: #{_forward_core.3} parent=11 // pred_region
          _
        $region32: #{_forward_core.3} parent=11 // pred_fallthru
          _
        // Predicated region
        $region33: #{_forward_core.3} parent=11 // pred_check
          %p490 = pneg %p345
        $region34: #{_forward_core.3} parent=11 // pred_check_branch
          %492 = sbr.rel (%p490) target = $region36
        $region35: #{_forward_core.3} parent=11 // pred_region
          _
        $region36: #{_forward_core.3} parent=11 // pred_fallthru
          _
        // Predicated region
        $region37: #{_forward_core.3} parent=11 // pred_check
          %p493 = pneg %p366
        $region38: #{_forward_core.3} parent=11 // pred_check_branch
          %495 = sbr.rel (%p493) target = $region40
        $region39: #{_forward_core.3} parent=11 // pred_region
          _
        $region40: #{_forward_core.3} parent=11 // pred_fallthru
          _
        // Predicated region
        $region41: #{_forward_core.3} parent=11 // pred_check
          %p496 = pneg %p387
        $region42: #{_forward_core.3} parent=11 // pred_check_branch
          %498 = sbr.rel (%p496) target = $region44
        $region43: #{_forward_core.3} parent=11 // pred_region
          _
        $region44: #{_forward_core.3} parent=11 // pred_fallthru
          _
        // Predicated region
        $region45: #{_forward_core.3} parent=11 // pred_check
          %p499 = pneg %p408
        $region46: #{_forward_core.3} parent=11 // pred_check_branch
          %501 = sbr.rel (%p499) target = $region48
        $region47: #{_forward_core.3} parent=11 // pred_region
          _
        $region48: #{_forward_core.3} parent=11 // pred_fallthru
          _
      $region12: #{_forward_core.3} parent=5 // pred_fallthru
        _
      %p502 = scmp.lt.s32.totalorder %s37, 2
      // Predicated region
      $region49: #{_forward_core.3} parent=5 // pred_check
        %p503 = pneg %p502
      $region50: #{_forward_core.3} parent=5 // pred_check_branch
        %505 = sbr.rel (%p503) target = $region52
      $region51: #{_forward_core.3} parent=5 // pred_region
        // Predicated region
        $region53: #{_forward_core.3} parent=51 // pred_check
          %p506 = pneg %p57
        $region54: #{_forward_core.3} parent=51 // pred_check_branch
          %508 = sbr.rel (%p506) target = $region56
        $region55: #{_forward_core.3} parent=51 // pred_region
          %p509 = scmp.lt.s32.totalorder %s37, 1
          %s510 = scalar_select %p509, %s37, 1
          %s511 = smul.addr %s510, 8
          %s512 = scalar_lea.vmem %s1, %s511
        $region56: #{_forward_core.3} parent=51 // pred_fallthru
          _
        // Predicated region
        $region57: #{_forward_core.3} parent=51 // pred_check
          %p513 = pneg %p83
        $region58: #{_forward_core.3} parent=51 // pred_check_branch
          %515 = sbr.rel (%p513) target = $region60
        $region59: #{_forward_core.3} parent=51 // pred_region
          %p516 = scmp.lt.s32.totalorder %s37, 1
          %s517 = scalar_select %p516, %s37, 1
          %s518 = smul.addr %s517, 8
          %s519 = scalar_lea.vmem %s2, %s518
        $region60: #{_forward_core.3} parent=51 // pred_fallthru
          _
        // Predicated region
        $region61: #{_forward_core.3} parent=51 // pred_check
          %p520 = pneg %p109
        $region62: #{_forward_core.3} parent=51 // pred_check_branch
          %522 = sbr.rel (%p520) target = $region64
        $region63: #{_forward_core.3} parent=51 // pred_region
          %p523 = scmp.lt.s32.totalorder %s37, 1
          %s524 = scalar_select %p523, %s37, 1
          %s525 = smul.addr %s524, 8
          %s526 = scalar_lea.vmem %s3, %s525
        $region64: #{_forward_core.3} parent=51 // pred_fallthru
          _
        // Predicated region
        $region65: #{_forward_core.3} parent=51 // pred_check
          %p527 = pneg %p135
        $region66: #{_forward_core.3} parent=51 // pred_check_branch
          %529 = sbr.rel (%p527) target = $region68
        $region67: #{_forward_core.3} parent=51 // pred_region
          %p530 = scmp.lt.s32.totalorder %s37, 1
          %s531 = scalar_select %p530, %s37, 1
          %s532 = smul.addr %s531, 2
          %s533 = smul.addr %s532, 8
          %s534 = scalar_lea.vmem %s4, %s533
        $region68: #{_forward_core.3} parent=51 // pred_fallthru
          _
        // Predicated region
        $region69: #{_forward_core.3} parent=51 // pred_check
          %p535 = pneg %p161
        $region70: #{_forward_core.3} parent=51 // pred_check_branch
          %537 = sbr.rel (%p535) target = $region72
        $region71: #{_forward_core.3} parent=51 // pred_region
          %p538 = scmp.lt.s32.totalorder %s37, 1
          %s539 = scalar_select %p538, %s37, 1
          %s540 = smul.addr %s539, 2
          %s541 = smul.addr %s540, 8
          %s542 = scalar_lea.vmem %s5, %s541
        $region72: #{_forward_core.3} parent=51 // pred_fallthru
          _
        // Predicated region
        $region73: #{_forward_core.3} parent=51 // pred_check
          %p543 = pneg %p187
        $region74: #{_forward_core.3} parent=51 // pred_check_branch
          %545 = sbr.rel (%p543) target = $region76
        $region75: #{_forward_core.3} parent=51 // pred_region
          %p546 = scmp.lt.s32.totalorder %s37, 1
          %s547 = scalar_select %p546, %s37, 1
          %s548 = smul.addr %s547, 8
          %s549 = scalar_lea.vmem %s6, %s548
        $region76: #{_forward_core.3} parent=51 // pred_fallthru
          _
        // Predicated region
        $region77: #{_forward_core.3} parent=51 // pred_check
          %p550 = pneg %p213
        $region78: #{_forward_core.3} parent=51 // pred_check_branch
          %552 = sbr.rel (%p550) target = $region80
        $region79: #{_forward_core.3} parent=51 // pred_region
          %p553 = scmp.lt.s32.totalorder %s37, 1
          %s554 = scalar_select %p553, %s37, 1
          %s555 = smul.addr %s554, 2
          %s556 = smul.addr %s555, 8
          %s557 = scalar_lea.vmem %s7, %s556
        $region80: #{_forward_core.3} parent=51 // pred_fallthru
          _
      $region52: #{_forward_core.3} parent=5 // pred_fallthru
        _
      %p558 = scmp.le.s32.totalorder 1, %s37
      %p559 = scmp.lt.s32.totalorder %s37, 3
      %p560 = pnand %p558, %p559
      %p561 = pneg %p560
      // Predicated region
      $region81: #{_forward_core.3} parent=5 // pred_check
        _
      $region82: #{_forward_core.3} parent=5 // pred_check_branch
        %563 = sbr.rel (%p560) target = $region84
      $region83: #{_forward_core.3} parent=5 // pred_region
        %s564 = ssub.s32 %s37, 1
        %p565 = scmp.lt.s32.totalorder %s42, 1
        %s566 = scalar_select %p565, %s42, 1
        %s567 = smul.addr %s566, 8
        %s568 = scalar_lea.vmem %s1, %s567
        %p569 = pneg %p63
        %p570 = pneg %p60
        %p571 = scmp.lt.s32.totalorder %s42, 1
        %s572 = scalar_select %p571, %s42, 1
        %s573 = smul.addr %s572, 8
        %s574 = scalar_lea.vmem %s2, %s573
        %p575 = pneg %p89
        %p576 = pneg %p86
        %p577 = scmp.lt.s32.totalorder %s42, 1
        %s578 = scalar_select %p577, %s42, 1
        %s579 = smul.addr %s578, 8
        %s580 = scalar_lea.vmem %s3, %s579
        %p581 = pneg %p115
        %p582 = pneg %p112
        %p583 = scmp.lt.s32.totalorder %s42, 1
        %s584 = scalar_select %p583, %s42, 1
        %s585 = smul.addr %s584, 2
        %s586 = smul.addr %s585, 8
        %s587 = scalar_lea.vmem %s4, %s586
        %p588 = pneg %p141
        %p589 = pneg %p138
        %p590 = scmp.lt.s32.totalorder %s42, 1
        %s591 = scalar_select %p590, %s42, 1
        %s592 = smul.addr %s591, 2
        %s593 = smul.addr %s592, 8
        %s594 = scalar_lea.vmem %s5, %s593
        %p595 = pneg %p167
        %p596 = pneg %p164
        %p597 = scmp.lt.s32.totalorder %s42, 1
        %s598 = scalar_select %p597, %s42, 1
        %s599 = smul.addr %s598, 8
        %s600 = scalar_lea.vmem %s6, %s599
        %p601 = pneg %p193
        %p602 = pneg %p190
        %p603 = scmp.lt.s32.totalorder %s42, 1
        %s604 = scalar_select %p603, %s42, 1
        %s605 = smul.addr %s604, 2
        %s606 = smul.addr %s605, 8
        %s607 = scalar_lea.vmem %s7, %s606
        %p608 = pneg %p219
        %p609 = pneg %p216
        %p610 = pneg %p240
        %p611 = pneg %p237
        %p612 = pneg %p261
        %p613 = pneg %p258
        %p614 = pneg %p282
        %p615 = pneg %p279
        %p616 = pneg %p303
        %p617 = pneg %p300
        %p618 = pneg %p324
        %p619 = pneg %p321
        %p620 = pneg %p345
        %p621 = pneg %p342
        %p622 = pneg %p366
        %p623 = pneg %p363
        %p624 = pneg %p387
        %p625 = pneg %p384
        %p626 = pneg %p408
        %p627 = pneg %p405
        %p628 = pneg %p434
        %p629 = pneg %p431
        %s630 = sand.u32 %s421, 1
        %s631 = scalar_lea.sflag [#allocation5], %s630
        %s632 = sand.u32 %s421, 1
        %s633 = smul.addr %s632, 8
        %s634 = scalar_lea.vmem [#allocation4], %s633
        %p635 = pneg %p460
        %p636 = pneg %p457
        %s637 = sand.u32 %s447, 1
        %s638 = scalar_lea.sflag [#allocation7], %s637
        %s639 = sand.u32 %s447, 1
        %s640 = smul.addr %s639, 16
        %s641 = scalar_lea.vmem [#allocation6], %s640
        %p642 = scmp.lt.s32.totalorder %s42, 1
        %s643 = scalar_select %p642, %s42, 1
        %s644 = smul.addr %s643, 8
        %s645 = scalar_lea.vmem %s1, %s644
        %p646 = scmp.lt.s32.totalorder %s42, 1
        %s647 = scalar_select %p646, %s42, 1
        %s648 = smul.addr %s647, 8
        %s649 = scalar_lea.vmem %s2, %s648
        %p650 = scmp.lt.s32.totalorder %s42, 1
        %s651 = scalar_select %p650, %s42, 1
        %s652 = smul.addr %s651, 8
        %s653 = scalar_lea.vmem %s3, %s652
        %p654 = scmp.lt.s32.totalorder %s42, 1
        %s655 = scalar_select %p654, %s42, 1
        %s656 = smul.addr %s655, 2
        %s657 = smul.addr %s656, 8
        %s658 = scalar_lea.vmem %s4, %s657
        %p659 = scmp.lt.s32.totalorder %s42, 1
        %s660 = scalar_select %p659, %s42, 1
        %s661 = smul.addr %s660, 2
        %s662 = smul.addr %s661, 8
        %s663 = scalar_lea.vmem %s5, %s662
        %p664 = scmp.lt.s32.totalorder %s42, 1
        %s665 = scalar_select %p664, %s42, 1
        %s666 = smul.addr %s665, 8
        %s667 = scalar_lea.vmem %s6, %s666
        %p668 = scmp.lt.s32.totalorder %s42, 1
        %s669 = scalar_select %p668, %s42, 1
        %s670 = smul.addr %s669, 2
        %s671 = smul.addr %s670, 8
        %s672 = scalar_lea.vmem %s7, %s671
        %v673 = vld [vmem:[%s645] sm:$0xff]
        %v674 = vld [vmem:[%s649] sm:$0xff]
        %v675 = vld [vmem:[%s653] sm:$0xff]
        %v676 = vlaneseq
        %v677 = vand.u32 %v676, 127
        %v678 = vld [vmem:[%s658] sm:$0xff]
        %v679 = vld [vmem:[%s658 + $0x8] sm:$0xff]
        %680 = vset.pattern.permute.xlu0 0
        %681 = vperm.xlu0 %680, %v678
        %v682 = vpop.permute.xlu0 %681
        %683 = vset.pattern.permute.xlu0 0
        %684 = vperm.xlu0 %683, %v679
        %v685 = vpop.permute.xlu0 %684
        %vm686 = vcmp.eq.s32.totalorder %v677, %v682
        %vm687 = vcmp.eq.s32.totalorder %v677, %v685
        %v688 = vsel %vm686, 1, 0
        %v689 = vsel %vm687, 1, 0
        %v690 = vcvt.s32.f32 %v688
        %v691 = vcvt.s32.f32 %v689
        %v692 = vld [vmem:[%s663] sm:$0xff]
        %v693 = vld [vmem:[%s663 + $0x8] sm:$0xff]
        %694 = vset.pattern.permute.xlu0 0
        %695 = vperm.xlu0 %694, %v692
        %v696 = vpop.permute.xlu0 %695
        %697 = vset.pattern.permute.xlu0 0
        %698 = vperm.xlu0 %697, %v693
        %v699 = vpop.permute.xlu0 %698
        %vm700 = vcmp.eq.s32.totalorder %v677, %v696
        %vm701 = vcmp.eq.s32.totalorder %v677, %v699
        %v702 = vsel %vm700, 1, 0
        %v703 = vsel %vm701, 1, 0
        %v704 = vcvt.s32.f32 %v702
        %v705 = vcvt.s32.f32 %v703
        %vm706 = vcmask 64512
        %v708 = vsel %vm706, %v704, 0
        %v711 = vsel %vm706, %v705, 0
        %713 = vmatprep.subr.mxu0 0.0
        %714 = vmatpush1.msra.mxu0 %v674
        %715 = vmatprep.subr.mxu0 0.0
        %716 = vmatpush1.msra.mxu0 0.0
        %717 = vmatprep.subr.mxu0 0.0
        %718 = vmatpush1.msra.mxu0 0.0
        %719 = vmatprep.subr.mxu0 0.0
        %720 = vmatpush1.msra.mxu0 0.0
        %721 = vmatprep.subr.mxu0 0.0
        %722 = vmatpush1.msra.mxu0 0.0
        %723 = vmatprep.subr.mxu0 0.0
        %724 = vmatpush1.msra.mxu0 0.0
        %725 = vmatprep.subr.mxu0 0.0
        %726 = vmatpush1.msra.mxu0 0.0
        %727 = vmatprep.subr.mxu0 0.0
        %728 = vmatpush1.msra.mxu0 0.0
        %729 = vmatprep.subr.mxu0 0.0
        %730 = vmatpush1.msra.mxu0 0.0
        %731 = vmatprep.subr.mxu0 0.0
        %732 = vmatpush1.msra.mxu0 0.0
        %733 = vmatprep.subr.mxu0 0.0
        %734 = vmatpush1.msra.mxu0 0.0
        %735 = vmatprep.subr.mxu0 0.0
        %736 = vmatpush1.msra.mxu0 0.0
        %737 = vmatprep.subr.mxu0 0.0
        %738 = vmatpush1.msra.mxu0 0.0
        %739 = vmatprep.subr.mxu0 0.0
        %740 = vmatpush1.msra.mxu0 0.0
        %741 = vmatprep.subr.mxu0 0.0
        %742 = vmatpush1.msra.mxu0 0.0
        %743 = vmatprep.subr.mxu0 0.0
        %744 = vmatpush1.msra.mxu0 0.0
        %745 = vmatprep.subr.mxu0 0.0
        %746 = vmatpush1.msra.mxu0 0.0
        %747 = vmatprep.subr.mxu0 0.0
        %748 = vmatpush1.msra.mxu0 0.0
        %749 = vmatprep.subr.mxu0 0.0
        %750 = vmatpush1.msra.mxu0 0.0
        %751 = vmatprep.subr.mxu0 0.0
        %752 = vmatpush1.msra.mxu0 0.0
        %753 = vmatprep.subr.mxu0 0.0
        %754 = vmatpush1.msra.mxu0 0.0
        %755 = vmatprep.subr.mxu0 0.0
        %756 = vmatpush1.msra.mxu0 0.0
        %757 = vmatprep.subr.mxu0 0.0
        %758 = vmatpush1.msra.mxu0 0.0
        %759 = vmatprep.subr.mxu0 0.0
        %760 = vmatpush1.msra.mxu0 0.0
        %761 = vmatprep.subr.mxu0 0.0
        %762 = vmatpush1.msra.mxu0 0.0
        %763 = vmatprep.subr.mxu0 0.0
        %764 = vmatpush1.msra.mxu0 0.0
        %765 = vmatprep.subr.mxu0 0.0
        %766 = vmatpush1.msra.mxu0 0.0
        %767 = vmatprep.subr.mxu0 0.0
        %768 = vmatpush1.msra.mxu0 0.0
        %769 = vmatprep.subr.mxu0 0.0
        %770 = vmatpush1.msra.mxu0 0.0
        %771 = vmatprep.subr.mxu0 0.0
        %772 = vmatpush1.msra.mxu0 0.0
        %773 = vmatprep.subr.mxu0 0.0
        %774 = vmatpush1.msra.mxu0 0.0
        %775 = vmatprep.subr.mxu0 0.0
        %776 = vmatpush1.msra.mxu0 0.0
        %777 = vmatprep.mubr.f32.mxu0 0.0
        %778 = vmatmul.mubr.f32.gmra.mrb[0].mxu0 %v708
        %v779 = vpop.f32.mrb[0].mxu0
        %v780 = vadd.f32 0.0, %v779
        %v781 = vpop.f32.mrb[0].mxu0
        %782 = vmatprep.mubr.f32.mxu0 0.0
        %783 = vmatmul.mubr.f32.gmra.mrb[0].mxu0 %v711
        %v784 = vpop.f32.mrb[0].mxu0
        %v785 = vadd.f32 0.0, %v784
        %v786 = vpop.f32.mrb[0].mxu0
        %787 = vdwg.mxu0
        %v789 = vsel %vm706, %v690, 0
        %v792 = vsel %vm706, %v691, 0
        %794 = vmatprep.subr.mxu0 0.0
        %795 = vmatpush1.msra.mxu0 %v673
        %796 = vmatprep.subr.mxu0 0.0
        %797 = vmatpush1.msra.mxu0 0.0
        %798 = vmatprep.subr.mxu0 0.0
        %799 = vmatpush1.msra.mxu0 0.0
        %800 = vmatprep.subr.mxu0 0.0
        %801 = vmatpush1.msra.mxu0 0.0
        %802 = vmatprep.subr.mxu0 0.0
        %803 = vmatpush1.msra.mxu0 0.0
        %804 = vmatprep.subr.mxu0 0.0
        %805 = vmatpush1.msra.mxu0 0.0
        %806 = vmatprep.subr.mxu0 0.0
        %807 = vmatpush1.msra.mxu0 0.0
        %808 = vmatprep.subr.mxu0 0.0
        %809 = vmatpush1.msra.mxu0 0.0
        %810 = vmatprep.subr.mxu0 0.0
        %811 = vmatpush1.msra.mxu0 0.0
        %812 = vmatprep.subr.mxu0 0.0
        %813 = vmatpush1.msra.mxu0 0.0
        %814 = vmatprep.subr.mxu0 0.0
        %815 = vmatpush1.msra.mxu0 0.0
        %816 = vmatprep.subr.mxu0 0.0
        %817 = vmatpush1.msra.mxu0 0.0
        %818 = vmatprep.subr.mxu0 0.0
        %819 = vmatpush1.msra.mxu0 0.0
        %820 = vmatprep.subr.mxu0 0.0
        %821 = vmatpush1.msra.mxu0 0.0
        %822 = vmatprep.subr.mxu0 0.0
        %823 = vmatpush1.msra.mxu0 0.0
        %824 = vmatprep.subr.mxu0 0.0
        %825 = vmatpush1.msra.mxu0 0.0
        %826 = vmatprep.subr.mxu0 0.0
        %827 = vmatpush1.msra.mxu0 0.0
        %828 = vmatprep.subr.mxu0 0.0
        %829 = vmatpush1.msra.mxu0 0.0
        %830 = vmatprep.subr.mxu0 0.0
        %831 = vmatpush1.msra.mxu0 0.0
        %832 = vmatprep.subr.mxu0 0.0
        %833 = vmatpush1.msra.mxu0 0.0
        %834 = vmatprep.subr.mxu0 0.0
        %835 = vmatpush1.msra.mxu0 0.0
        %836 = vmatprep.subr.mxu0 0.0
        %837 = vmatpush1.msra.mxu0 0.0
        %838 = vmatprep.subr.mxu0 0.0
        %839 = vmatpush1.msra.mxu0 0.0
        %840 = vmatprep.subr.mxu0 0.0
        %841 = vmatpush1.msra.mxu0 0.0
        %842 = vmatprep.subr.mxu0 0.0
        %843 = vmatpush1.msra.mxu0 0.0
        %844 = vmatprep.subr.mxu0 0.0
        %845 = vmatpush1.msra.mxu0 0.0
        %846 = vmatprep.subr.mxu0 0.0
        %847 = vmatpush1.msra.mxu0 0.0
        %848 = vmatprep.subr.mxu0 0.0
        %849 = vmatpush1.msra.mxu0 0.0
        %850 = vmatprep.subr.mxu0 0.0
        %851 = vmatpush1.msra.mxu0 0.0
        %852 = vmatprep.subr.mxu0 0.0
        %853 = vmatpush1.msra.mxu0 0.0
        %854 = vmatprep.subr.mxu0 0.0
        %855 = vmatpush1.msra.mxu0 0.0
        %856 = vmatprep.subr.mxu0 0.0
        %857 = vmatpush1.msra.mxu0 0.0
        %858 = vmatprep.mubr.f32.mxu0 0.0
        %859 = vmatmul.mubr.f32.gmra.mrb[0].mxu0 %v789
        %v860 = vpop.f32.mrb[0].mxu0
        %v861 = vadd.f32 %v780, %v860
        %v862 = vpop.f32.mrb[0].mxu0
        %863 = vmatprep.mubr.f32.mxu0 0.0
        %864 = vmatmul.mubr.f32.gmra.mrb[0].mxu0 %v792
        %v865 = vpop.f32.mrb[0].mxu0
        %v866 = vadd.f32 %v785, %v865
        %v867 = vpop.f32.mrb[0].mxu0
        %868 = vdwg.mxu0
        %v869 = vld [vmem:[%s8] sm:$0x1]
        %v871 = vlaneseq
        %v872 = vshrl.u32 %v871, 7
        %v873 = vsub.s32 0, %v872
        %v874 = vrot.slane %v869, %v873
        %v876 = vadd.f32 %v861, %v874
        %v877 = vadd.f32 %v866, %v874
        %v878 = vmax.f32 %v876, 0.0
        %v879 = vmax.f32 %v877, 0.0
        %v880 = vld [vmem:[%s667] sm:$0xff]
        %881 = vset.pattern.permute.xlu0 0
        %882 = vperm.xlu0 %881, %v880
        %v883 = vpop.permute.xlu0 %882
        %vm884 = vcmp.eq.s32.totalorder %v677, %v883
        %v885 = vsel %vm884, 1, 0
        %v886 = vcvt.s32.f32 %v885
        %vm887 = vcmask 130048
        %v889 = vsel %vm887, %v886, 0
        %891 = vmatprep.subr.mxu0 0.0
        %892 = vmatpush1.msra.mxu0 %v878
        %893 = vmatprep.subr.mxu0 0.0
        %894 = vmatpush1.msra.mxu0 %v879
        %895 = vmatprep.subr.mxu0 0.0
        %896 = vmatpush1.msra.mxu0 0.0
        %897 = vmatprep.subr.mxu0 0.0
        %898 = vmatpush1.msra.mxu0 0.0
        %899 = vmatprep.subr.mxu0 0.0
        %900 = vmatpush1.msra.mxu0 0.0
        %901 = vmatprep.subr.mxu0 0.0
        %902 = vmatpush1.msra.mxu0 0.0
        %903 = vmatprep.subr.mxu0 0.0
        %904 = vmatpush1.msra.mxu0 0.0
        %905 = vmatprep.subr.mxu0 0.0
        %906 = vmatpush1.msra.mxu0 0.0
        %907 = vmatprep.subr.mxu0 0.0
        %908 = vmatpush1.msra.mxu0 0.0
        %909 = vmatprep.subr.mxu0 0.0
        %910 = vmatpush1.msra.mxu0 0.0
        %911 = vmatprep.subr.mxu0 0.0
        %912 = vmatpush1.msra.mxu0 0.0
        %913 = vmatprep.subr.mxu0 0.0
        %914 = vmatpush1.msra.mxu0 0.0
        %915 = vmatprep.subr.mxu0 0.0
        %916 = vmatpush1.msra.mxu0 0.0
        %917 = vmatprep.subr.mxu0 0.0
        %918 = vmatpush1.msra.mxu0 0.0
        %919 = vmatprep.subr.mxu0 0.0
        %920 = vmatpush1.msra.mxu0 0.0
        %921 = vmatprep.subr.mxu0 0.0
        %922 = vmatpush1.msra.mxu0 0.0
        %923 = vmatprep.subr.mxu0 0.0
        %924 = vmatpush1.msra.mxu0 0.0
        %925 = vmatprep.subr.mxu0 0.0
        %926 = vmatpush1.msra.mxu0 0.0
        %927 = vmatprep.subr.mxu0 0.0
        %928 = vmatpush1.msra.mxu0 0.0
        %929 = vmatprep.subr.mxu0 0.0
        %930 = vmatpush1.msra.mxu0 0.0
        %931 = vmatprep.subr.mxu0 0.0
        %932 = vmatpush1.msra.mxu0 0.0
        %933 = vmatprep.subr.mxu0 0.0
        %934 = vmatpush1.msra.mxu0 0.0
        %935 = vmatprep.subr.mxu0 0.0
        %936 = vmatpush1.msra.mxu0 0.0
        %937 = vmatprep.subr.mxu0 0.0
        %938 = vmatpush1.msra.mxu0 0.0
        %939 = vmatprep.subr.mxu0 0.0
        %940 = vmatpush1.msra.mxu0 0.0
        %941 = vmatprep.subr.mxu0 0.0
        %942 = vmatpush1.msra.mxu0 0.0
        %943 = vmatprep.subr.mxu0 0.0
        %944 = vmatpush1.msra.mxu0 0.0
        %945 = vmatprep.subr.mxu0 0.0
        %946 = vmatpush1.msra.mxu0 0.0
        %947 = vmatprep.subr.mxu0 0.0
        %948 = vmatpush1.msra.mxu0 0.0
        %949 = vmatprep.subr.mxu0 0.0
        %950 = vmatpush1.msra.mxu0 0.0
        %951 = vmatprep.subr.mxu0 0.0
        %952 = vmatpush1.msra.mxu0 0.0
        %953 = vmatprep.subr.mxu0 0.0
        %954 = vmatpush1.msra.mxu0 0.0
        %955 = vmatprep.mubr.f32.mxu0 0.0
        %956 = vmatmul.mubr.f32.gmra.mrb[0].mxu0 %v889
        %v957 = vpop.f32.mrb[0].mxu0
        %v958 = vadd.f32 0.0, %v957
        %v959 = vpop.f32.mrb[0].mxu0
        %960 = vdwg.mxu0
        %s961 = sld [smem:[#allocation3 + %s42]]
        %p962 = scmp.gt.s32.totalorder %s961, 0
        %s963 = scalar_select %p962, 1, 0
        %s964 = scvt.s32.f32 %s963
        %s965 = sadd.f32 %s964, 2.0
        %v966 = vstv %s965
        %v967 = vmul.f32 %v966, %v675
        %v968 = vld [vmem:[%s9] sm:$0xff]
        %v969 = vld [vmem:[%s9 + $0x8] sm:$0xff]
        %v970 = vld [vmem:[%s9 + $0x10] sm:$0xff]
        %v971 = vld [vmem:[%s9 + $0x18] sm:$0xff]
        %v972 = vld [vmem:[%s9 + $0x20] sm:$0xff]
        %v973 = vld [vmem:[%s9 + $0x28] sm:$0xff]
        %v974 = vld [vmem:[%s9 + $0x30] sm:$0xff]
        %v975 = vld [vmem:[%s9 + $0x38] sm:$0xff]
        %v976 = vld [vmem:[%s9 + $0x40] sm:$0xff]
        %v977 = vld [vmem:[%s9 + $0x48] sm:$0xff]
        %v978 = vld [vmem:[%s9 + $0x50] sm:$0xff]
        %v979 = vld [vmem:[%s9 + $0x58] sm:$0xff]
        %v980 = vld [vmem:[%s9 + $0x60] sm:$0xff]
        %v981 = vld [vmem:[%s9 + $0x68] sm:$0xff]
        %v982 = vld [vmem:[%s9 + $0x70] sm:$0xff]
        %v983 = vld [vmem:[%s9 + $0x78] sm:$0xff]
        %v984 = vld [vmem:[%s10] sm:$0x1]
        %v986 = vlaneseq
        %v987 = vshrl.u32 %v986, 7
        %v988 = vsub.s32 0, %v987
        %v989 = vrot.slane %v984, %v988
        %991 = vmatprep.subr.mxu0 0.0
        %992 = vmatpush1.msra.mxu0 %v968
        %993 = vmatprep.subr.mxu0 0.0
        %994 = vmatpush1.msra.mxu0 %v969
        %995 = vmatprep.subr.mxu0 0.0
        %996 = vmatpush1.msra.mxu0 %v970
        %997 = vmatprep.subr.mxu0 0.0
        %998 = vmatpush1.msra.mxu0 %v971
        %999 = vmatprep.subr.mxu0 0.0
        %1000 = vmatpush1.msra.mxu0 %v972
        %1001 = vmatprep.subr.mxu0 0.0
        %1002 = vmatpush1.msra.mxu0 %v973
        %1003 = vmatprep.subr.mxu0 0.0
        %1004 = vmatpush1.msra.mxu0 %v974
        %1005 = vmatprep.subr.mxu0 0.0
        %1006 = vmatpush1.msra.mxu0 %v975
        %1007 = vmatprep.subr.mxu0 0.0
        %1008 = vmatpush1.msra.mxu0 %v976
        %1009 = vmatprep.subr.mxu0 0.0
        %1010 = vmatpush1.msra.mxu0 %v977
        %1011 = vmatprep.subr.mxu0 0.0
        %1012 = vmatpush1.msra.mxu0 %v978
        %1013 = vmatprep.subr.mxu0 0.0
        %1014 = vmatpush1.msra.mxu0 %v979
        %1015 = vmatprep.subr.mxu0 0.0
        %1016 = vmatpush1.msra.mxu0 %v980
        %1017 = vmatprep.subr.mxu0 0.0
        %1018 = vmatpush1.msra.mxu0 %v981
        %1019 = vmatprep.subr.mxu0 0.0
        %1020 = vmatpush1.msra.mxu0 %v982
        %1021 = vmatprep.subr.mxu0 0.0
        %1022 = vmatpush1.msra.mxu0 %v983
        %1023 = vmatprep.subr.mxu0 0.0
        %1024 = vmatpush1.msra.mxu0 0.0
        %1025 = vmatprep.subr.mxu0 0.0
        %1026 = vmatpush1.msra.mxu0 0.0
        %1027 = vmatprep.subr.mxu0 0.0
        %1028 = vmatpush1.msra.mxu0 0.0
        %1029 = vmatprep.subr.mxu0 0.0
        %1030 = vmatpush1.msra.mxu0 0.0
        %1031 = vmatprep.subr.mxu0 0.0
        %1032 = vmatpush1.msra.mxu0 0.0
        %1033 = vmatprep.subr.mxu0 0.0
        %1034 = vmatpush1.msra.mxu0 0.0
        %1035 = vmatprep.subr.mxu0 0.0
        %1036 = vmatpush1.msra.mxu0 0.0
        %1037 = vmatprep.subr.mxu0 0.0
        %1038 = vmatpush1.msra.mxu0 0.0
        %1039 = vmatprep.subr.mxu0 0.0
        %1040 = vmatpush1.msra.mxu0 0.0
        %1041 = vmatprep.subr.mxu0 0.0
        %1042 = vmatpush1.msra.mxu0 0.0
        %1043 = vmatprep.subr.mxu0 0.0
        %1044 = vmatpush1.msra.mxu0 0.0
        %1045 = vmatprep.subr.mxu0 0.0
        %1046 = vmatpush1.msra.mxu0 0.0
        %1047 = vmatprep.subr.mxu0 0.0
        %1048 = vmatpush1.msra.mxu0 0.0
        %1049 = vmatprep.subr.mxu0 0.0
        %1050 = vmatpush1.msra.mxu0 0.0
        %1051 = vmatprep.subr.mxu0 0.0
        %1052 = vmatpush1.msra.mxu0 0.0
        %1053 = vmatprep.subr.mxu0 0.0
        %1054 = vmatpush1.msra.mxu0 0.0
        %1055 = vmatprep.mubr.f32.mxu0 0.0
        %1056 = vmatmul.mubr.f32.gmra.mrb[0].mxu0 %v967
        %v1057 = vpop.f32.mrb[0].mxu0
        %v1058 = vadd.f32 %v989, %v1057
        %v1059 = vpop.f32.mrb[0].mxu0
        %1060 = vdwg.mxu0
        %vm1061 = vcmp.lt.s32.totalorder %v677, 64
        %v1062 = vsel %vm1061, 1, 0
        %v1063 = vcvt.s32.f32 %v1062
        %v1064 = vmul.f32 %v1058, %v1063
        %1065 = vadd.xlane.f32.xlu0 %v1064
        %v1066 = vpop.xlane.xlu0 %1065
        %v1067 = vmul.f32 %v1066, 0.015625
        %v1068 = vsub.f32 %v1058, %v1067
        %v1069 = vmul.f32 %v1068, %v1063
        %v1070 = vmul.f32 %v1069, %v1069
        %1071 = vadd.xlane.f32.xlu0 %v1070
        %v1072 = vpop.xlane.xlu0 %1071
        %v1073 = vmul.f32 %v1072, 0.015625
        %v1074 = vadd.f32 %v1073, 1e-05
        %v1075 = vrsqrt.pop %v1074
        %v1076 = vmul.f32 %v1069, %v1075
        %v1077 = vld [vmem:[%s11] sm:$0x1]
        %v1079 = vlaneseq
        %v1080 = vshrl.u32 %v1079, 7
        %v1081 = vsub.s32 0, %v1080
        %v1082 = vrot.slane %v1077, %v1081
        %v1084 = vmul.f32 %v1076, %v1082
        %v1085 = vld [vmem:[%s12] sm:$0x1]
        %v1087 = vlaneseq
        %v1088 = vshrl.u32 %v1087, 7
        %v1089 = vsub.s32 0, %v1088
        %v1090 = vrot.slane %v1085, %v1089
        %v1092 = vadd.f32 %v1084, %v1090
        %v1093 = vmax.f32 %v1092, 0.0
        %v1094 = vld [vmem:[%s13] sm:$0xff]
        %v1095 = vld [vmem:[%s13 + $0x8] sm:$0xff]
        %v1096 = vld [vmem:[%s13 + $0x10] sm:$0xff]
        %v1097 = vld [vmem:[%s13 + $0x18] sm:$0xff]
        %v1098 = vld [vmem:[%s13 + $0x20] sm:$0xff]
        %v1099 = vld [vmem:[%s13 + $0x28] sm:$0xff]
        %v1100 = vld [vmem:[%s13 + $0x30] sm:$0xff]
        %v1101 = vld [vmem:[%s13 + $0x38] sm:$0xff]
        %v1102 = vld [vmem:[%s13 + $0x40] sm:$0xff]
        %v1103 = vld [vmem:[%s13 + $0x48] sm:$0xff]
        %v1104 = vld [vmem:[%s13 + $0x50] sm:$0xff]
        %v1105 = vld [vmem:[%s13 + $0x58] sm:$0xff]
        %v1106 = vld [vmem:[%s13 + $0x60] sm:$0xff]
        %v1107 = vld [vmem:[%s13 + $0x68] sm:$0xff]
        %v1108 = vld [vmem:[%s13 + $0x70] sm:$0xff]
        %v1109 = vld [vmem:[%s13 + $0x78] sm:$0xff]
        %v1110 = vld [vmem:[%s14] sm:$0x1]
        %v1112 = vlaneseq
        %v1113 = vshrl.u32 %v1112, 7
        %v1114 = vsub.s32 0, %v1113
        %v1115 = vrot.slane %v1110, %v1114
        %1117 = vmatprep.subr.mxu0 0.0
        %1118 = vmatpush1.msra.mxu0 %v1094
        %1119 = vmatprep.subr.mxu0 0.0
        %1120 = vmatpush1.msra.mxu0 %v1095
        %1121 = vmatprep.subr.mxu0 0.0
        %1122 = vmatpush1.msra.mxu0 %v1096
        %1123 = vmatprep.subr.mxu0 0.0
        %1124 = vmatpush1.msra.mxu0 %v1097
        %1125 = vmatprep.subr.mxu0 0.0
        %1126 = vmatpush1.msra.mxu0 %v1098
        %1127 = vmatprep.subr.mxu0 0.0
        %1128 = vmatpush1.msra.mxu0 %v1099
        %1129 = vmatprep.subr.mxu0 0.0
        %1130 = vmatpush1.msra.mxu0 %v1100
        %1131 = vmatprep.subr.mxu0 0.0
        %1132 = vmatpush1.msra.mxu0 %v1101
        %1133 = vmatprep.subr.mxu0 0.0
        %1134 = vmatpush1.msra.mxu0 %v1102
        %1135 = vmatprep.subr.mxu0 0.0
        %1136 = vmatpush1.msra.mxu0 %v1103
        %1137 = vmatprep.subr.mxu0 0.0
        %1138 = vmatpush1.msra.mxu0 %v1104
        %1139 = vmatprep.subr.mxu0 0.0
        %1140 = vmatpush1.msra.mxu0 %v1105
        %1141 = vmatprep.subr.mxu0 0.0
        %1142 = vmatpush1.msra.mxu0 %v1106
        %1143 = vmatprep.subr.mxu0 0.0
        %1144 = vmatpush1.msra.mxu0 %v1107
        %1145 = vmatprep.subr.mxu0 0.0
        %1146 = vmatpush1.msra.mxu0 %v1108
        %1147 = vmatprep.subr.mxu0 0.0
        %1148 = vmatpush1.msra.mxu0 %v1109
        %1149 = vmatprep.subr.mxu0 0.0
        %1150 = vmatpush1.msra.mxu0 0.0
        %1151 = vmatprep.subr.mxu0 0.0
        %1152 = vmatpush1.msra.mxu0 0.0
        %1153 = vmatprep.subr.mxu0 0.0
        %1154 = vmatpush1.msra.mxu0 0.0
        %1155 = vmatprep.subr.mxu0 0.0
        %1156 = vmatpush1.msra.mxu0 0.0
        %1157 = vmatprep.subr.mxu0 0.0
        %1158 = vmatpush1.msra.mxu0 0.0
        %1159 = vmatprep.subr.mxu0 0.0
        %1160 = vmatpush1.msra.mxu0 0.0
        %1161 = vmatprep.subr.mxu0 0.0
        %1162 = vmatpush1.msra.mxu0 0.0
        %1163 = vmatprep.subr.mxu0 0.0
        %1164 = vmatpush1.msra.mxu0 0.0
        %1165 = vmatprep.subr.mxu0 0.0
        %1166 = vmatpush1.msra.mxu0 0.0
        %1167 = vmatprep.subr.mxu0 0.0
        %1168 = vmatpush1.msra.mxu0 0.0
        %1169 = vmatprep.subr.mxu0 0.0
        %1170 = vmatpush1.msra.mxu0 0.0
        %1171 = vmatprep.subr.mxu0 0.0
        %1172 = vmatpush1.msra.mxu0 0.0
        %1173 = vmatprep.subr.mxu0 0.0
        %1174 = vmatpush1.msra.mxu0 0.0
        %1175 = vmatprep.subr.mxu0 0.0
        %1176 = vmatpush1.msra.mxu0 0.0
        %1177 = vmatprep.subr.mxu0 0.0
        %1178 = vmatpush1.msra.mxu0 0.0
        %1179 = vmatprep.subr.mxu0 0.0
        %1180 = vmatpush1.msra.mxu0 0.0
        %1181 = vmatprep.mubr.f32.mxu0 0.0
        %1182 = vmatmul.mubr.f32.gmra.mrb[0].mxu0 %v1093
        %v1183 = vpop.f32.mrb[0].mxu0
        %v1184 = vadd.f32 %v1115, %v1183
        %v1185 = vpop.f32.mrb[0].mxu0
        %1186 = vdwg.mxu0
        %1187 = vst [vmem:[%s634] sm:$0xff] %v1184
        %v1188 = vld [vmem:[%s672] sm:$0xff]
        %v1189 = vld [vmem:[%s672 + $0x8] sm:$0xff]
        %1190 = vset.pattern.permute.xlu0 0
        %1191 = vperm.xlu0 %1190, %v1188
        %v1192 = vpop.permute.xlu0 %1191
        %1193 = vset.pattern.permute.xlu0 0
        %1194 = vperm.xlu0 %1193, %v1189
        %v1195 = vpop.permute.xlu0 %1194
        %vm1196 = vcmp.eq.s32.totalorder %v677, %v1192
        %vm1197 = vcmp.eq.s32.totalorder %v677, %v1195
        %v1198 = vsel %vm1196, 1, 0
        %v1199 = vsel %vm1197, 1, 0
        %v1200 = vcvt.s32.f32 %v1198
        %v1201 = vcvt.s32.f32 %v1199
        %v1203 = vsel %vm706, %v1200, 0
        %v1206 = vsel %vm706, %v1201, 0
        %1208 = vmatprep.subr.mxu0 0.0
        %1209 = vmatpush1.msra.mxu0 %v958
        %1210 = vmatprep.subr.mxu0 0.0
        %1211 = vmatpush1.msra.mxu0 0.0
        %1212 = vmatprep.subr.mxu0 0.0
        %1213 = vmatpush1.msra.mxu0 0.0
        %1214 = vmatprep.subr.mxu0 0.0
        %1215 = vmatpush1.msra.mxu0 0.0
        %1216 = vmatprep.subr.mxu0 0.0
        %1217 = vmatpush1.msra.mxu0 0.0
        %1218 = vmatprep.subr.mxu0 0.0
        %1219 = vmatpush1.msra.mxu0 0.0
        %1220 = vmatprep.subr.mxu0 0.0
        %1221 = vmatpush1.msra.mxu0 0.0
        %1222 = vmatprep.subr.mxu0 0.0
        %1223 = vmatpush1.msra.mxu0 0.0
        %1224 = vmatprep.subr.mxu0 0.0
        %1225 = vmatpush1.msra.mxu0 0.0
        %1226 = vmatprep.subr.mxu0 0.0
        %1227 = vmatpush1.msra.mxu0 0.0
        %1228 = vmatprep.subr.mxu0 0.0
        %1229 = vmatpush1.msra.mxu0 0.0
        %1230 = vmatprep.subr.mxu0 0.0
        %1231 = vmatpush1.msra.mxu0 0.0
        %1232 = vmatprep.subr.mxu0 0.0
        %1233 = vmatpush1.msra.mxu0 0.0
        %1234 = vmatprep.subr.mxu0 0.0
        %1235 = vmatpush1.msra.mxu0 0.0
        %1236 = vmatprep.subr.mxu0 0.0
        %1237 = vmatpush1.msra.mxu0 0.0
        %1238 = vmatprep.subr.mxu0 0.0
        %1239 = vmatpush1.msra.mxu0 0.0
        %1240 = vmatprep.subr.mxu0 0.0
        %1241 = vmatpush1.msra.mxu0 0.0
        %1242 = vmatprep.subr.mxu0 0.0
        %1243 = vmatpush1.msra.mxu0 0.0
        %1244 = vmatprep.subr.mxu0 0.0
        %1245 = vmatpush1.msra.mxu0 0.0
        %1246 = vmatprep.subr.mxu0 0.0
        %1247 = vmatpush1.msra.mxu0 0.0
        %1248 = vmatprep.subr.mxu0 0.0
        %1249 = vmatpush1.msra.mxu0 0.0
        %1250 = vmatprep.subr.mxu0 0.0
        %1251 = vmatpush1.msra.mxu0 0.0
        %1252 = vmatprep.subr.mxu0 0.0
        %1253 = vmatpush1.msra.mxu0 0.0
        %1254 = vmatprep.subr.mxu0 0.0
        %1255 = vmatpush1.msra.mxu0 0.0
        %1256 = vmatprep.subr.mxu0 0.0
        %1257 = vmatpush1.msra.mxu0 0.0
        %1258 = vmatprep.subr.mxu0 0.0
        %1259 = vmatpush1.msra.mxu0 0.0
        %1260 = vmatprep.subr.mxu0 0.0
        %1261 = vmatpush1.msra.mxu0 0.0
        %1262 = vmatprep.subr.mxu0 0.0
        %1263 = vmatpush1.msra.mxu0 0.0
        %1264 = vmatprep.subr.mxu0 0.0
        %1265 = vmatpush1.msra.mxu0 0.0
        %1266 = vmatprep.subr.mxu0 0.0
        %1267 = vmatpush1.msra.mxu0 0.0
        %1268 = vmatprep.subr.mxu0 0.0
        %1269 = vmatpush1.msra.mxu0 0.0
        %1270 = vmatprep.subr.mxu0 0.0
        %1271 = vmatpush1.msra.mxu0 0.0
        %1272 = vmatprep.mubr.f32.mxu0 0.0
        %1273 = vmatmul.mubr.f32.gmra.mrb[0].mxu0 %v1203
        %v1274 = vpop.f32.mrb[0].mxu0
        %v1275 = vadd.f32 0.0, %v1274
        %v1276 = vpop.f32.mrb[0].mxu0
        %1277 = vmatprep.mubr.f32.mxu0 0.0
        %1278 = vmatmul.mubr.f32.gmra.mrb[0].mxu0 %v1206
        %v1279 = vpop.f32.mrb[0].mxu0
        %v1280 = vadd.f32 0.0, %v1279
        %v1281 = vpop.f32.mrb[0].mxu0
        %1282 = vdwg.mxu0
        %v1283 = vstv %s964
        %v1284 = vmul.f32 %v1283, %v1275
        %v1285 = vmul.f32 %v1283, %v1280
        %s1286 = ssub.f32 1.0, %s964
        %v1287 = vstv %s1286
        %v1288 = vmul.f32 %v1287, %v878
        %v1289 = vmul.f32 %v1287, %v879
        %v1290 = vadd.f32 %v1284, %v1288
        %v1291 = vadd.f32 %v1285, %v1289
        %v1292 = vld [vmem:[%s15] sm:$0xff]
        %v1293 = vld [vmem:[%s15 + $0x8] sm:$0xff]
        %v1294 = vld [vmem:[%s15 + $0x10] sm:$0xff]
        %v1295 = vld [vmem:[%s15 + $0x18] sm:$0xff]
        %v1296 = vld [vmem:[%s15 + $0x20] sm:$0xff]
        %v1297 = vld [vmem:[%s15 + $0x28] sm:$0xff]
        %v1298 = vld [vmem:[%s15 + $0x30] sm:$0xff]
        %v1299 = vld [vmem:[%s15 + $0x38] sm:$0xff]
        %v1300 = vld [vmem:[%s15 + $0x40] sm:$0xff]
        %v1301 = vld [vmem:[%s15 + $0x48] sm:$0xff]
        %v1302 = vld [vmem:[%s15 + $0x50] sm:$0xff]
        %v1303 = vld [vmem:[%s15 + $0x58] sm:$0xff]
        %v1304 = vld [vmem:[%s15 + $0x60] sm:$0xff]
        %v1305 = vld [vmem:[%s15 + $0x68] sm:$0xff]
        %v1306 = vld [vmem:[%s15 + $0x70] sm:$0xff]
        %v1307 = vld [vmem:[%s15 + $0x78] sm:$0xff]
        %v1308 = vld [vmem:[%s16] sm:$0x1]
        %v1310 = vlaneseq
        %v1311 = vshrl.u32 %v1310, 7
        %v1312 = vsub.s32 0, %v1311
        %v1313 = vrot.slane %v1308, %v1312
        %1315 = vmatprep.subr.mxu0 0.0
        %1316 = vmatpush1.msra.mxu0 %v1292
        %1317 = vmatprep.subr.mxu0 0.0
        %1318 = vmatpush1.msra.mxu0 %v1293
        %1319 = vmatprep.subr.mxu0 0.0
        %1320 = vmatpush1.msra.mxu0 %v1294
        %1321 = vmatprep.subr.mxu0 0.0
        %1322 = vmatpush1.msra.mxu0 %v1295
        %1323 = vmatprep.subr.mxu0 0.0
        %1324 = vmatpush1.msra.mxu0 %v1296
        %1325 = vmatprep.subr.mxu0 0.0
        %1326 = vmatpush1.msra.mxu0 %v1297
        %1327 = vmatprep.subr.mxu0 0.0
        %1328 = vmatpush1.msra.mxu0 %v1298
        %1329 = vmatprep.subr.mxu0 0.0
        %1330 = vmatpush1.msra.mxu0 %v1299
        %1331 = vmatprep.subr.mxu0 0.0
        %1332 = vmatpush1.msra.mxu0 %v1300
        %1333 = vmatprep.subr.mxu0 0.0
        %1334 = vmatpush1.msra.mxu0 %v1301
        %1335 = vmatprep.subr.mxu0 0.0
        %1336 = vmatpush1.msra.mxu0 %v1302
        %1337 = vmatprep.subr.mxu0 0.0
        %1338 = vmatpush1.msra.mxu0 %v1303
        %1339 = vmatprep.subr.mxu0 0.0
        %1340 = vmatpush1.msra.mxu0 %v1304
        %1341 = vmatprep.subr.mxu0 0.0
        %1342 = vmatpush1.msra.mxu0 %v1305
        %1343 = vmatprep.subr.mxu0 0.0
        %1344 = vmatpush1.msra.mxu0 %v1306
        %1345 = vmatprep.subr.mxu0 0.0
        %1346 = vmatpush1.msra.mxu0 %v1307
        %1347 = vmatprep.subr.mxu0 0.0
        %1348 = vmatpush1.msra.mxu0 0.0
        %1349 = vmatprep.subr.mxu0 0.0
        %1350 = vmatpush1.msra.mxu0 0.0
        %1351 = vmatprep.subr.mxu0 0.0
        %1352 = vmatpush1.msra.mxu0 0.0
        %1353 = vmatprep.subr.mxu0 0.0
        %1354 = vmatpush1.msra.mxu0 0.0
        %1355 = vmatprep.subr.mxu0 0.0
        %1356 = vmatpush1.msra.mxu0 0.0
        %1357 = vmatprep.subr.mxu0 0.0
        %1358 = vmatpush1.msra.mxu0 0.0
        %1359 = vmatprep.subr.mxu0 0.0
        %1360 = vmatpush1.msra.mxu0 0.0
        %1361 = vmatprep.subr.mxu0 0.0
        %1362 = vmatpush1.msra.mxu0 0.0
        %1363 = vmatprep.subr.mxu0 0.0
        %1364 = vmatpush1.msra.mxu0 0.0
        %1365 = vmatprep.subr.mxu0 0.0
        %1366 = vmatpush1.msra.mxu0 0.0
        %1367 = vmatprep.subr.mxu0 0.0
        %1368 = vmatpush1.msra.mxu0 0.0
        %1369 = vmatprep.subr.mxu0 0.0
        %1370 = vmatpush1.msra.mxu0 0.0
        %1371 = vmatprep.subr.mxu0 0.0
        %1372 = vmatpush1.msra.mxu0 0.0
        %1373 = vmatprep.subr.mxu0 0.0
        %1374 = vmatpush1.msra.mxu0 0.0
        %1375 = vmatprep.subr.mxu0 0.0
        %1376 = vmatpush1.msra.mxu0 0.0
        %1377 = vmatprep.subr.mxu0 0.0
        %1378 = vmatpush1.msra.mxu0 0.0
        %1379 = vmatprep.mubr.f32.mxu0 0.0
        %1380 = vmatmul.mubr.f32.gmra.mrb[0].mxu0 %v1290
        %v1381 = vpop.f32.mrb[0].mxu0
        %v1382 = vadd.f32 %v1313, %v1381
        %v1383 = vpop.f32.mrb[0].mxu0
        %1384 = vmatprep.mubr.f32.mxu0 0.0
        %1385 = vmatmul.mubr.f32.gmra.mrb[0].mxu0 %v1291
        %v1386 = vpop.f32.mrb[0].mxu0
        %v1387 = vadd.f32 %v1313, %v1386
        %v1388 = vpop.f32.mrb[0].mxu0
        %1389 = vdwg.mxu0
        %1390 = vst [vmem:[%s641] sm:$0xff] %v1382
        %1391 = vst [vmem:[%s641 + $0x8] sm:$0xff] %v1387
        %s1392 = sand.u32 %s421, 1
        %s1393 = scalar_lea.sflag [#allocation5], %s1392
        %s1394 = sand.u32 %s421, 1
        %s1395 = smul.addr %s1394, 8
        %s1396 = scalar_lea.vmem [#allocation4], %s1395
        %s1397 = sand.u32 %s447, 1
        %s1398 = scalar_lea.sflag [#allocation7], %s1397
        %s1399 = sand.u32 %s447, 1
        %s1400 = smul.addr %s1399, 16
        %s1401 = scalar_lea.vmem [#allocation6], %s1400
        // Predicated region
        $region85: #{_forward_core.3} parent=83 // pred_check
          %p1402 = pneg %p431
        $region86: #{_forward_core.3} parent=83 // pred_check_branch
          %1404 = sbr.rel (%p1402) target = $region88
        $region87: #{_forward_core.3} parent=83 // pred_region
          %s1406 = ssub.s32 128, 128
          %1407 = vsyncadd %s1393, %s1406
          %s1408 = smul.addr %s42, 128
          %s1409 = scalar_lea.hbm %s17, %s1408
          %s1411 = sshll.u32 %s1396, 4
          %s1412 = int_to_ptr.vmem [resolvable:$true] %s1411
          %1414 = dma.vmem_to_hbm [thread:$0]  %s1412, 128, %s1409, %s1393
        $region88: #{_forward_core.3} parent=83 // pred_fallthru
          _
        // Predicated region
        $region89: #{_forward_core.3} parent=83 // pred_check
          %p1415 = pneg %p457
        $region90: #{_forward_core.3} parent=83 // pred_check_branch
          %1417 = sbr.rel (%p1415) target = $region92
        $region91: #{_forward_core.3} parent=83 // pred_region
          %s1419 = ssub.s32 256, 256
          %1420 = vsyncadd %s1398, %s1419
          %s1421 = smul.addr %s42, 2
          %s1422 = smul.addr %s1421, 128
          %s1423 = scalar_lea.hbm %s18, %s1422
          %s1424 = sshll.u32 %s1401, 4
          %s1425 = int_to_ptr.vmem [resolvable:$true] %s1424
          %1430 = dma.vmem_to_hbm [thread:$0]  %s1425, 256, %s1423, %s1398, 128, 128, 8
        $region92: #{_forward_core.3} parent=83 // pred_fallthru
          _
      $region84: #{_forward_core.3} parent=5 // pred_fallthru
        _
      %p1431 = scmp.le.s32.totalorder 2, %s37
      // Predicated region
      $region93: #{_forward_core.3} parent=5 // pred_check
        %p1432 = pneg %p1431
      $region94: #{_forward_core.3} parent=5 // pred_check_branch
        %1434 = sbr.rel (%p1432) target = $region96
      $region95: #{_forward_core.3} parent=5 // pred_region
        %s1435 = ssub.s32 %s37, 2
        // Predicated region
        $region97: #{_forward_core.3} parent=95 // pred_check
          %p1436 = pneg %p437
        $region98: #{_forward_core.3} parent=95 // pred_check_branch
          %1438 = sbr.rel (%p1436) target = $region100
        $region99: #{_forward_core.3} parent=95 // pred_region
          %s1439 = sand.u32 %s422, 1
          %s1440 = scalar_lea.sflag [#allocation5], %s1439
          %s1441 = sand.u32 %s422, 1
          %s1442 = smul.addr %s1441, 8
          %s1443 = scalar_lea.vmem [#allocation4], %s1442
          %1444 = dma.done %s1440, 128
        $region100: #{_forward_core.3} parent=95 // pred_fallthru
          _
        // Predicated region
        $region101: #{_forward_core.3} parent=95 // pred_check
          %p1445 = pneg %p463
        $region102: #{_forward_core.3} parent=95 // pred_check_branch
          %1447 = sbr.rel (%p1445) target = $region104
        $region103: #{_forward_core.3} parent=95 // pred_region
          %s1448 = sand.u32 %s448, 1
          %s1449 = scalar_lea.sflag [#allocation7], %s1448
          %s1450 = sand.u32 %s448, 1
          %s1451 = smul.addr %s1450, 16
          %s1452 = scalar_lea.vmem [#allocation6], %s1451
          %1453 = dma.done %s1449, 256
        $region104: #{_forward_core.3} parent=95 // pred_fallthru
          _
      $region96: #{_forward_core.3} parent=5 // pred_fallthru
        _
    $region6: #{_forward_core.3} parent=1 // loop_footer
      %s41 = sadd.s32 1, %s37
    $region7: #{_forward_core.3} parent=1 // loop_footer_branch
      %36 = sbr.rel target = $region3
    $region8: #{_forward_core.3} parent=1 // loop_exit
      _
    %1454 = vsyncpa [#allocation5], 1
    %s1455 = scalar_lea.sflag [#allocation5], 1
    %1456 = vsyncpa %s1455, 1
    %1457 = vsyncpa [#allocation7], 1
    %s1458 = scalar_lea.sflag [#allocation7], 1
    %1459 = vsyncpa %s1458, 1

</llo_original>
